<compile_context>
chip_gen: v7x
topology: tpu7x:2x2x1
jax: 0.10.0
libtpu: 0.0.40
codegen_flags: <defaults>
</compile_context>

<pallas_src>
import functools

import jax
import jax.numpy as jnp
from jax.experimental import pallas as pl
from jax.experimental.pallas import tpu as pltpu

_NEG = -1e30  # "minus infinity" that stays NaN-free under subtraction


def _sinkhorn_kernel(scores_ref, out_ref, *, num_iters, n_valid, m_valid, masked):
    x = scores_ref[...].astype(jnp.float32)            # (Np, Mp), VMEM-resident

    if masked:
        rows = jax.lax.broadcasted_iota(jnp.int32, x.shape, 0)
        cols = jax.lax.broadcasted_iota(jnp.int32, x.shape, 1)
        valid = (rows < n_valid) & (cols < m_valid)
        x = jnp.where(valid, x, _NEG)

    for _ in range(num_iters):                          # static -> fully unrolled
        # logsumexp over columns (dim=1), subtracted from every row
        m1 = jnp.max(x, axis=1, keepdims=True)
        x = x - (m1 + jnp.log(jnp.sum(jnp.exp(x - m1), axis=1, keepdims=True)))
        if masked:
            x = jnp.where(valid, x, _NEG)
        # logsumexp over rows (dim=0), subtracted from every column
        m0 = jnp.max(x, axis=0, keepdims=True)
        x = x - (m0 + jnp.log(jnp.sum(jnp.exp(x - m0), axis=0, keepdims=True)))
        if masked:
            x = jnp.where(valid, x, _NEG)

    out_ref[...] = jnp.exp(x)                           # padded entries -> 0


def sinkhorn_normalization(scores, num_iters=10):
    scores = jnp.asarray(scores, jnp.float32)
    n, m = scores.shape
    n_pad = -(-n // 8) * 8          # sublane-align
    m_pad = -(-m // 128) * 128      # lane-align (lane-dense stores)
    masked = (n_pad != n) or (m_pad != m)
    scores_p = (jnp.pad(scores, ((0, n_pad - n), (0, m_pad - m)),
                        constant_values=_NEG)
                if masked else scores)

    # Whole matrix as one VMEM-resident block; guard the scoped-VMEM budget
    # (worst case v7x: 32 MiB scoped / 64 MiB physical).
    bytes_per_buf = n_pad * m_pad * 4
    if 4 * bytes_per_buf > 24 * 1024 * 1024:
        # TODO(synk): tiled multi-pass Sinkhorn (per-row-tile pass + cross-tile
        # column-reduction scratch) for matrices that do not fit VMEM.
        raise NotImplementedError("scores matrix too large for single-block kernel")

    kernel = functools.partial(_sinkhorn_kernel, num_iters=num_iters,
                               n_valid=n, m_valid=m, masked=masked)
    out_p = pl.pallas_call(
        kernel,
        out_shape=jax.ShapeDtypeStruct((n_pad, m_pad), jnp.float32),
        grid=(1,),
        in_specs=[pl.BlockSpec((n_pad, m_pad), lambda i: (0, 0))],
        out_specs=pl.BlockSpec((n_pad, m_pad), lambda i: (0, 0)),
        compiler_params=pltpu.CompilerParams(dimension_semantics=("arbitrary",)),
    )(scores_p)
    return out_p[:n, :m] if masked else out_p


def _reference(scores, num_iters=10):
    x = jnp.asarray(scores, jnp.float32)
    for _ in range(num_iters):
        x = x - jax.scipy.special.logsumexp(x, axis=1, keepdims=True)
        x = x - jax.scipy.special.logsumexp(x, axis=0, keepdims=True)
    return jnp.exp(x)


if __name__ == "__main__":
    key = jax.random.PRNGKey(0)
    k1, k2 = jax.random.split(key)

    # Aligned case: lane-dense fast path, no padding/masking.
    scores_a = jax.random.normal(k1, (64, 128), jnp.float32)
    out_a = sinkhorn_normalization(scores_a, num_iters=10)
    jax.block_until_ready(out_a)
    ref_a = _reference(scores_a, 10)
    assert jnp.allclose(out_a, ref_a, atol=1e-4, rtol=1e-4)
    # Last op is a column normalization -> every column sums to 1.
    assert jnp.allclose(jnp.sum(out_a, axis=0), 1.0, atol=1e-4)

    # Non-aligned case: exercises the pad + in-kernel re-masking path.
    scores_b = jax.random.normal(k2, (50, 60), jnp.float32)
    out_b = sinkhorn_normalization(scores_b, num_iters=10)
    jax.block_until_ready(out_b)
    ref_b = _reference(scores_b, 10)
    assert jnp.allclose(out_b, ref_b, atol=1e-4, rtol=1e-4)
    assert jnp.allclose(jnp.sum(out_b, axis=0), 1.0, atol=1e-4)

    print("KERNEL_OK")
</pallas_src>

<mosaic_0001>
module attributes {stable_mosaic.version = 11 : i64} {
  func.func @_sinkhorn_kernel(%arg0: i32, %arg1: memref<64x128xf32, #tpu.memory_space<vmem>>, %arg2: memref<64x128xf32, #tpu.memory_space<vmem>>) attributes {dimension_semantics = [#tpu.dimension_semantics<arbitrary>], iteration_bounds = array<i64: 1>, scalar_prefetch = 0 : i64, scratch_operands = 0 : i64, tpu.core_type = #tpu.core_type<tc>, window_params = [{pipeline_mode = #tpu.pipeline_mode<synchronous>, transform_indices = @transform_0, window_bounds = array<i64: 64, 128>}, {pipeline_mode = #tpu.pipeline_mode<synchronous>, transform_indices = @transform_1, window_bounds = array<i64: 64, 128>}]} {
    %c0 = arith.constant 0 : index
    %c0_0 = arith.constant 0 : index
    %0 = vector.load %arg1[%c0, %c0_0] : memref<64x128xf32, #tpu.memory_space<vmem>>, vector<64x128xf32>
    %cst = arith.constant dense<0xFF800000> : vector<64xf32>
    %1 = vector.multi_reduction <maximumf>, %0, %cst [1] : vector<64x128xf32> to vector<64xf32>
    %2 = vector.shape_cast %1 : vector<64xf32> to vector<64x1xf32>
    %3 = vector.broadcast %2 : vector<64x1xf32> to vector<64x128xf32>
    %4 = arith.subf %0, %3 : vector<64x128xf32>
    %5 = math.exp %4 : vector<64x128xf32>
    %cst_1 = arith.constant dense<0.000000e+00> : vector<64xf32>
    %6 = vector.multi_reduction <add>, %5, %cst_1 [1] : vector<64x128xf32> to vector<64xf32>
    %7 = vector.shape_cast %6 : vector<64xf32> to vector<64x1xf32>
    %8 = math.log %7 : vector<64x1xf32>
    %9 = arith.addf %2, %8 : vector<64x1xf32>
    %10 = vector.broadcast %9 : vector<64x1xf32> to vector<64x128xf32>
    %11 = arith.subf %0, %10 : vector<64x128xf32>
    %cst_2 = arith.constant dense<0xFF800000> : vector<128xf32>
    %12 = vector.multi_reduction <maximumf>, %11, %cst_2 [0] : vector<64x128xf32> to vector<128xf32>
    %13 = vector.shape_cast %12 : vector<128xf32> to vector<1x128xf32>
    %14 = vector.broadcast %13 : vector<1x128xf32> to vector<64x128xf32>
    %15 = arith.subf %11, %14 : vector<64x128xf32>
    %16 = math.exp %15 : vector<64x128xf32>
    %cst_3 = arith.constant dense<0.000000e+00> : vector<128xf32>
    %17 = vector.multi_reduction <add>, %16, %cst_3 [0] : vector<64x128xf32> to vector<128xf32>
    %18 = vector.shape_cast %17 : vector<128xf32> to vector<1x128xf32>
    %19 = math.log %18 : vector<1x128xf32>
    %20 = arith.addf %13, %19 : vector<1x128xf32>
    %21 = vector.broadcast %20 : vector<1x128xf32> to vector<64x128xf32>
    %22 = arith.subf %11, %21 : vector<64x128xf32>
    %cst_4 = arith.constant dense<0xFF800000> : vector<64xf32>
    %23 = vector.multi_reduction <maximumf>, %22, %cst_4 [1] : vector<64x128xf32> to vector<64xf32>
    %24 = vector.shape_cast %23 : vector<64xf32> to vector<64x1xf32>
    %25 = vector.broadcast %24 : vector<64x1xf32> to vector<64x128xf32>
    %26 = arith.subf %22, %25 : vector<64x128xf32>
    %27 = math.exp %26 : vector<64x128xf32>
    %cst_5 = arith.constant dense<0.000000e+00> : vector<64xf32>
    %28 = vector.multi_reduction <add>, %27, %cst_5 [1] : vector<64x128xf32> to vector<64xf32>
    %29 = vector.shape_cast %28 : vector<64xf32> to vector<64x1xf32>
    %30 = math.log %29 : vector<64x1xf32>
    %31 = arith.addf %24, %30 : vector<64x1xf32>
    %32 = vector.broadcast %31 : vector<64x1xf32> to vector<64x128xf32>
    %33 = arith.subf %22, %32 : vector<64x128xf32>
    %cst_6 = arith.constant dense<0xFF800000> : vector<128xf32>
    %34 = vector.multi_reduction <maximumf>, %33, %cst_6 [0] : vector<64x128xf32> to vector<128xf32>
    %35 = vector.shape_cast %34 : vector<128xf32> to vector<1x128xf32>
    %36 = vector.broadcast %35 : vector<1x128xf32> to vector<64x128xf32>
    %37 = arith.subf %33, %36 : vector<64x128xf32>
    %38 = math.exp %37 : vector<64x128xf32>
    %cst_7 = arith.constant dense<0.000000e+00> : vector<128xf32>
    %39 = vector.multi_reduction <add>, %38, %cst_7 [0] : vector<64x128xf32> to vector<128xf32>
    %40 = vector.shape_cast %39 : vector<128xf32> to vector<1x128xf32>
    %41 = math.log %40 : vector<1x128xf32>
    %42 = arith.addf %35, %41 : vector<1x128xf32>
    %43 = vector.broadcast %42 : vector<1x128xf32> to vector<64x128xf32>
    %44 = arith.subf %33, %43 : vector<64x128xf32>
    %cst_8 = arith.constant dense<0xFF800000> : vector<64xf32>
    %45 = vector.multi_reduction <maximumf>, %44, %cst_8 [1] : vector<64x128xf32> to vector<64xf32>
    %46 = vector.shape_cast %45 : vector<64xf32> to vector<64x1xf32>
    %47 = vector.broadcast %46 : vector<64x1xf32> to vector<64x128xf32>
    %48 = arith.subf %44, %47 : vector<64x128xf32>
    %49 = math.exp %48 : vector<64x128xf32>
    %cst_9 = arith.constant dense<0.000000e+00> : vector<64xf32>
    %50 = vector.multi_reduction <add>, %49, %cst_9 [1] : vector<64x128xf32> to vector<64xf32>
    %51 = vector.shape_cast %50 : vector<64xf32> to vector<64x1xf32>
    %52 = math.log %51 : vector<64x1xf32>
    %53 = arith.addf %46, %52 : vector<64x1xf32>
    %54 = vector.broadcast %53 : vector<64x1xf32> to vector<64x128xf32>
    %55 = arith.subf %44, %54 : vector<64x128xf32>
    %cst_10 = arith.constant dense<0xFF800000> : vector<128xf32>
    %56 = vector.multi_reduction <maximumf>, %55, %cst_10 [0] : vector<64x128xf32> to vector<128xf32>
    %57 = vector.shape_cast %56 : vector<128xf32> to vector<1x128xf32>
    %58 = vector.broadcast %57 : vector<1x128xf32> to vector<64x128xf32>
    %59 = arith.subf %55, %58 : vector<64x128xf32>
    %60 = math.exp %59 : vector<64x128xf32>
    %cst_11 = arith.constant dense<0.000000e+00> : vector<128xf32>
    %61 = vector.multi_reduction <add>, %60, %cst_11 [0] : vector<64x128xf32> to vector<128xf32>
    %62 = vector.shape_cast %61 : vector<128xf32> to vector<1x128xf32>
    %63 = math.log %62 : vector<1x128xf32>
    %64 = arith.addf %57, %63 : vector<1x128xf32>
    %65 = vector.broadcast %64 : vector<1x128xf32> to vector<64x128xf32>
    %66 = arith.subf %55, %65 : vector<64x128xf32>
    %cst_12 = arith.constant dense<0xFF800000> : vector<64xf32>
    %67 = vector.multi_reduction <maximumf>, %66, %cst_12 [1] : vector<64x128xf32> to vector<64xf32>
    %68 = vector.shape_cast %67 : vector<64xf32> to vector<64x1xf32>
    %69 = vector.broadcast %68 : vector<64x1xf32> to vector<64x128xf32>
    %70 = arith.subf %66, %69 : vector<64x128xf32>
    %71 = math.exp %70 : vector<64x128xf32>
    %cst_13 = arith.constant dense<0.000000e+00> : vector<64xf32>
    %72 = vector.multi_reduction <add>, %71, %cst_13 [1] : vector<64x128xf32> to vector<64xf32>
    %73 = vector.shape_cast %72 : vector<64xf32> to vector<64x1xf32>
    %74 = math.log %73 : vector<64x1xf32>
    %75 = arith.addf %68, %74 : vector<64x1xf32>
    %76 = vector.broadcast %75 : vector<64x1xf32> to vector<64x128xf32>
    %77 = arith.subf %66, %76 : vector<64x128xf32>
    %cst_14 = arith.constant dense<0xFF800000> : vector<128xf32>
    %78 = vector.multi_reduction <maximumf>, %77, %cst_14 [0] : vector<64x128xf32> to vector<128xf32>
    %79 = vector.shape_cast %78 : vector<128xf32> to vector<1x128xf32>
    %80 = vector.broadcast %79 : vector<1x128xf32> to vector<64x128xf32>
    %81 = arith.subf %77, %80 : vector<64x128xf32>
    %82 = math.exp %81 : vector<64x128xf32>
    %cst_15 = arith.constant dense<0.000000e+00> : vector<128xf32>
    %83 = vector.multi_reduction <add>, %82, %cst_15 [0] : vector<64x128xf32> to vector<128xf32>
    %84 = vector.shape_cast %83 : vector<128xf32> to vector<1x128xf32>
    %85 = math.log %84 : vector<1x128xf32>
    %86 = arith.addf %79, %85 : vector<1x128xf32>
    %87 = vector.broadcast %86 : vector<1x128xf32> to vector<64x128xf32>
    %88 = arith.subf %77, %87 : vector<64x128xf32>
    %cst_16 = arith.constant dense<0xFF800000> : vector<64xf32>
    %89 = vector.multi_reduction <maximumf>, %88, %cst_16 [1] : vector<64x128xf32> to vector<64xf32>
    %90 = vector.shape_cast %89 : vector<64xf32> to vector<64x1xf32>
    %91 = vector.broadcast %90 : vector<64x1xf32> to vector<64x128xf32>
    %92 = arith.subf %88, %91 : vector<64x128xf32>
    %93 = math.exp %92 : vector<64x128xf32>
    %cst_17 = arith.constant dense<0.000000e+00> : vector<64xf32>
    %94 = vector.multi_reduction <add>, %93, %cst_17 [1] : vector<64x128xf32> to vector<64xf32>
    %95 = vector.shape_cast %94 : vector<64xf32> to vector<64x1xf32>
    %96 = math.log %95 : vector<64x1xf32>
    %97 = arith.addf %90, %96 : vector<64x1xf32>
    %98 = vector.broadcast %97 : vector<64x1xf32> to vector<64x128xf32>
    %99 = arith.subf %88, %98 : vector<64x128xf32>
    %cst_18 = arith.constant dense<0xFF800000> : vector<128xf32>
    %100 = vector.multi_reduction <maximumf>, %99, %cst_18 [0] : vector<64x128xf32> to vector<128xf32>
    %101 = vector.shape_cast %100 : vector<128xf32> to vector<1x128xf32>
    %102 = vector.broadcast %101 : vector<1x128xf32> to vector<64x128xf32>
    %103 = arith.subf %99, %102 : vector<64x128xf32>
    %104 = math.exp %103 : vector<64x128xf32>
    %cst_19 = arith.constant dense<0.000000e+00> : vector<128xf32>
    %105 = vector.multi_reduction <add>, %104, %cst_19 [0] : vector<64x128xf32> to vector<128xf32>
    %106 = vector.shape_cast %105 : vector<128xf32> to vector<1x128xf32>
    %107 = math.log %106 : vector<1x128xf32>
    %108 = arith.addf %101, %107 : vector<1x128xf32>
    %109 = vector.broadcast %108 : vector<1x128xf32> to vector<64x128xf32>
    %110 = arith.subf %99, %109 : vector<64x128xf32>
    %cst_20 = arith.constant dense<0xFF800000> : vector<64xf32>
    %111 = vector.multi_reduction <maximumf>, %110, %cst_20 [1] : vector<64x128xf32> to vector<64xf32>
    %112 = vector.shape_cast %111 : vector<64xf32> to vector<64x1xf32>
    %113 = vector.broadcast %112 : vector<64x1xf32> to vector<64x128xf32>
    %114 = arith.subf %110, %113 : vector<64x128xf32>
    %115 = math.exp %114 : vector<64x128xf32>
    %cst_21 = arith.constant dense<0.000000e+00> : vector<64xf32>
    %116 = vector.multi_reduction <add>, %115, %cst_21 [1] : vector<64x128xf32> to vector<64xf32>
    %117 = vector.shape_cast %116 : vector<64xf32> to vector<64x1xf32>
    %118 = math.log %117 : vector<64x1xf32>
    %119 = arith.addf %112, %118 : vector<64x1xf32>
    %120 = vector.broadcast %119 : vector<64x1xf32> to vector<64x128xf32>
    %121 = arith.subf %110, %120 : vector<64x128xf32>
    %cst_22 = arith.constant dense<0xFF800000> : vector<128xf32>
    %122 = vector.multi_reduction <maximumf>, %121, %cst_22 [0] : vector<64x128xf32> to vector<128xf32>
    %123 = vector.shape_cast %122 : vector<128xf32> to vector<1x128xf32>
    %124 = vector.broadcast %123 : vector<1x128xf32> to vector<64x128xf32>
    %125 = arith.subf %121, %124 : vector<64x128xf32>
    %126 = math.exp %125 : vector<64x128xf32>
    %cst_23 = arith.constant dense<0.000000e+00> : vector<128xf32>
    %127 = vector.multi_reduction <add>, %126, %cst_23 [0] : vector<64x128xf32> to vector<128xf32>
    %128 = vector.shape_cast %127 : vector<128xf32> to vector<1x128xf32>
    %129 = math.log %128 : vector<1x128xf32>
    %130 = arith.addf %123, %129 : vector<1x128xf32>
    %131 = vector.broadcast %130 : vector<1x128xf32> to vector<64x128xf32>
    %132 = arith.subf %121, %131 : vector<64x128xf32>
    %cst_24 = arith.constant dense<0xFF800000> : vector<64xf32>
    %133 = vector.multi_reduction <maximumf>, %132, %cst_24 [1] : vector<64x128xf32> to vector<64xf32>
    %134 = vector.shape_cast %133 : vector<64xf32> to vector<64x1xf32>
    %135 = vector.broadcast %134 : vector<64x1xf32> to vector<64x128xf32>
    %136 = arith.subf %132, %135 : vector<64x128xf32>
    %137 = math.exp %136 : vector<64x128xf32>
    %cst_25 = arith.constant dense<0.000000e+00> : vector<64xf32>
    %138 = vector.multi_reduction <add>, %137, %cst_25 [1] : vector<64x128xf32> to vector<64xf32>
    %139 = vector.shape_cast %138 : vector<64xf32> to vector<64x1xf32>
    %140 = math.log %139 : vector<64x1xf32>
    %141 = arith.addf %134, %140 : vector<64x1xf32>
    %142 = vector.broadcast %141 : vector<64x1xf32> to vector<64x128xf32>
    %143 = arith.subf %132, %142 : vector<64x128xf32>
    %cst_26 = arith.constant dense<0xFF800000> : vector<128xf32>
    %144 = vector.multi_reduction <maximumf>, %143, %cst_26 [0] : vector<64x128xf32> to vector<128xf32>
    %145 = vector.shape_cast %144 : vector<128xf32> to vector<1x128xf32>
    %146 = vector.broadcast %145 : vector<1x128xf32> to vector<64x128xf32>
    %147 = arith.subf %143, %146 : vector<64x128xf32>
    %148 = math.exp %147 : vector<64x128xf32>
    %cst_27 = arith.constant dense<0.000000e+00> : vector<128xf32>
    %149 = vector.multi_reduction <add>, %148, %cst_27 [0] : vector<64x128xf32> to vector<128xf32>
    %150 = vector.shape_cast %149 : vector<128xf32> to vector<1x128xf32>
    %151 = math.log %150 : vector<1x128xf32>
    %152 = arith.addf %145, %151 : vector<1x128xf32>
    %153 = vector.broadcast %152 : vector<1x128xf32> to vector<64x128xf32>
    %154 = arith.subf %143, %153 : vector<64x128xf32>
    %cst_28 = arith.constant dense<0xFF800000> : vector<64xf32>
    %155 = vector.multi_reduction <maximumf>, %154, %cst_28 [1] : vector<64x128xf32> to vector<64xf32>
    %156 = vector.shape_cast %155 : vector<64xf32> to vector<64x1xf32>
    %157 = vector.broadcast %156 : vector<64x1xf32> to vector<64x128xf32>
    %158 = arith.subf %154, %157 : vector<64x128xf32>
    %159 = math.exp %158 : vector<64x128xf32>
    %cst_29 = arith.constant dense<0.000000e+00> : vector<64xf32>
    %160 = vector.multi_reduction <add>, %159, %cst_29 [1] : vector<64x128xf32> to vector<64xf32>
    %161 = vector.shape_cast %160 : vector<64xf32> to vector<64x1xf32>
    %162 = math.log %161 : vector<64x1xf32>
    %163 = arith.addf %156, %162 : vector<64x1xf32>
    %164 = vector.broadcast %163 : vector<64x1xf32> to vector<64x128xf32>
    %165 = arith.subf %154, %164 : vector<64x128xf32>
    %cst_30 = arith.constant dense<0xFF800000> : vector<128xf32>
    %166 = vector.multi_reduction <maximumf>, %165, %cst_30 [0] : vector<64x128xf32> to vector<128xf32>
    %167 = vector.shape_cast %166 : vector<128xf32> to vector<1x128xf32>
    %168 = vector.broadcast %167 : vector<1x128xf32> to vector<64x128xf32>
    %169 = arith.subf %165, %168 : vector<64x128xf32>
    %170 = math.exp %169 : vector<64x128xf32>
    %cst_31 = arith.constant dense<0.000000e+00> : vector<128xf32>
    %171 = vector.multi_reduction <add>, %170, %cst_31 [0] : vector<64x128xf32> to vector<128xf32>
    %172 = vector.shape_cast %171 : vector<128xf32> to vector<1x128xf32>
    %173 = math.log %172 : vector<1x128xf32>
    %174 = arith.addf %167, %173 : vector<1x128xf32>
    %175 = vector.broadcast %174 : vector<1x128xf32> to vector<64x128xf32>
    %176 = arith.subf %165, %175 : vector<64x128xf32>
    %cst_32 = arith.constant dense<0xFF800000> : vector<64xf32>
    %177 = vector.multi_reduction <maximumf>, %176, %cst_32 [1] : vector<64x128xf32> to vector<64xf32>
    %178 = vector.shape_cast %177 : vector<64xf32> to vector<64x1xf32>
    %179 = vector.broadcast %178 : vector<64x1xf32> to vector<64x128xf32>
    %180 = arith.subf %176, %179 : vector<64x128xf32>
    %181 = math.exp %180 : vector<64x128xf32>
    %cst_33 = arith.constant dense<0.000000e+00> : vector<64xf32>
    %182 = vector.multi_reduction <add>, %181, %cst_33 [1] : vector<64x128xf32> to vector<64xf32>
    %183 = vector.shape_cast %182 : vector<64xf32> to vector<64x1xf32>
    %184 = math.log %183 : vector<64x1xf32>
    %185 = arith.addf %178, %184 : vector<64x1xf32>
    %186 = vector.broadcast %185 : vector<64x1xf32> to vector<64x128xf32>
    %187 = arith.subf %176, %186 : vector<64x128xf32>
    %cst_34 = arith.constant dense<0xFF800000> : vector<128xf32>
    %188 = vector.multi_reduction <maximumf>, %187, %cst_34 [0] : vector<64x128xf32> to vector<128xf32>
    %189 = vector.shape_cast %188 : vector<128xf32> to vector<1x128xf32>
    %190 = vector.broadcast %189 : vector<1x128xf32> to vector<64x128xf32>
    %191 = arith.subf %187, %190 : vector<64x128xf32>
    %192 = math.exp %191 : vector<64x128xf32>
    %cst_35 = arith.constant dense<0.000000e+00> : vector<128xf32>
    %193 = vector.multi_reduction <add>, %192, %cst_35 [0] : vector<64x128xf32> to vector<128xf32>
    %194 = vector.shape_cast %193 : vector<128xf32> to vector<1x128xf32>
    %195 = math.log %194 : vector<1x128xf32>
    %196 = arith.addf %189, %195 : vector<1x128xf32>
    %197 = vector.broadcast %196 : vector<1x128xf32> to vector<64x128xf32>
    %198 = arith.subf %187, %197 : vector<64x128xf32>
    %cst_36 = arith.constant dense<0xFF800000> : vector<64xf32>
    %199 = vector.multi_reduction <maximumf>, %198, %cst_36 [1] : vector<64x128xf32> to vector<64xf32>
    %200 = vector.shape_cast %199 : vector<64xf32> to vector<64x1xf32>
    %201 = vector.broadcast %200 : vector<64x1xf32> to vector<64x128xf32>
    %202 = arith.subf %198, %201 : vector<64x128xf32>
    %203 = math.exp %202 : vector<64x128xf32>
    %cst_37 = arith.constant dense<0.000000e+00> : vector<64xf32>
    %204 = vector.multi_reduction <add>, %203, %cst_37 [1] : vector<64x128xf32> to vector<64xf32>
    %205 = vector.shape_cast %204 : vector<64xf32> to vector<64x1xf32>
    %206 = math.log %205 : vector<64x1xf32>
    %207 = arith.addf %200, %206 : vector<64x1xf32>
    %208 = vector.broadcast %207 : vector<64x1xf32> to vector<64x128xf32>
    %209 = arith.subf %198, %208 : vector<64x128xf32>
    %cst_38 = arith.constant dense<0xFF800000> : vector<128xf32>
    %210 = vector.multi_reduction <maximumf>, %209, %cst_38 [0] : vector<64x128xf32> to vector<128xf32>
    %211 = vector.shape_cast %210 : vector<128xf32> to vector<1x128xf32>
    %212 = vector.broadcast %211 : vector<1x128xf32> to vector<64x128xf32>
    %213 = arith.subf %209, %212 : vector<64x128xf32>
    %214 = math.exp %213 : vector<64x128xf32>
    %cst_39 = arith.constant dense<0.000000e+00> : vector<128xf32>
    %215 = vector.multi_reduction <add>, %214, %cst_39 [0] : vector<64x128xf32> to vector<128xf32>
    %216 = vector.shape_cast %215 : vector<128xf32> to vector<1x128xf32>
    %217 = math.log %216 : vector<1x128xf32>
    %218 = arith.addf %211, %217 : vector<1x128xf32>
    %219 = vector.broadcast %218 : vector<1x128xf32> to vector<64x128xf32>
    %220 = arith.subf %209, %219 : vector<64x128xf32>
    %221 = math.exp %220 : vector<64x128xf32>
    %c0_40 = arith.constant 0 : index
    %c0_41 = arith.constant 0 : index
    %222 = vector.load %arg2[%c0_40, %c0_41] : memref<64x128xf32, #tpu.memory_space<vmem>>, vector<64x128xf32>
    tpu.vector_store %arg2[%c0_40, %c0_41], %221 {strides = array<i32>} : memref<64x128xf32, #tpu.memory_space<vmem>>, vector<64x128xf32>,
    return
  }
  func.func @transform_0(%arg0: i32) -> (i32, i32) {
    %c0_i32 = arith.constant 0 : i32
    %c0_i32_0 = arith.constant 0 : i32
    %c0_i32_1 = arith.constant 0 : i32
    return %c0_i32, %c0_i32_0 : i32, i32
  }
  func.func @transform_1(%arg0: i32) -> (i32, i32) {
    %c0_i32 = arith.constant 0 : i32
    %c0_i32_0 = arith.constant 0 : i32
    %c0_i32_1 = arith.constant 0 : i32
    return %c0_i32, %c0_i32_0 : i32, i32
  }
}

</mosaic_0001>

<llo_original>
// kernel: tpu_custom_call.1
$region0: #{tpu_custom_call.1}
  #allocation0 [shape = 'u32[]', space=smem, size = 0x4, offset = 0x4, fixed_abs, tag = 'smem constant byte address 0x4 - core index']
  #allocation1 [shape = 'u32[144,128]{1,0:T(1,128)}', space=vmem, size = 0x12000, scoped, tag = 'internal scratch']
  %s0 = inlined_call_operand.hbm [shape: f32[64,128], index: 0, kind: input, shape index: {}]
  %s1 = inlined_call_operand.hbm [shape: f32[64,128], index: 1, kind: output, shape index: {}]
  %s2 = sld [smem:[#allocation0]]
  $region18: #{tpu_custom_call.1} parent=0
    _
  %s4 = ssub.s32 1, %s2
  %s5 = scalar_select 0, %s4, %s2
  $region1: #{tpu_custom_call.1} parent=0
    #allocation2 [shape = 'u8[32768]{0}', space=vmem, size = 0x8000, scoped, tag = 'input window, operand 0, single buffered']
    #allocation3 [shape = 's32[1]{0}', space=sflag, size = 0x4, scoped, tag = 'scoped memory for tpu_custom_call.1']
    #allocation4 [shape = 's32[1]{0}', space=sflag, size = 0x4, scoped, tag = 'scoped memory for tpu_custom_call.1']
    #allocation5 [shape = 'u8[32768]{0}', space=vmem, size = 0x8000, scoped, tag = 'output window, operand 0, single buffered']
    %6 = vsyncpa [#allocation3], 0
    %7 = vsyncpa [#allocation4], 0
    // Predicated region
    $region2: #{tpu_custom_call.1} parent=1 // pred_check
      _
    $region3: #{tpu_custom_call.1} parent=1 // pred_check_branch
      %9 = sbr.rel (0) target = $region5
    $region4: #{tpu_custom_call.1} parent=1 // pred_region
      %s11 = ssub.s32 1024, 1024
      %12 = vsyncadd [#allocation3], %s11
      %s13 = sshll.u32 [#allocation2], 4
      %s14 = int_to_ptr.vmem [resolvable:$true] %s13
      %19 = dma.hbm_to_vmem [thread:$0]  %s0, 1024, %s14, [#allocation3], 128, 128, 8
    $region5: #{tpu_custom_call.1} parent=1 // pred_fallthru
      _
    // Predicated region
    $region6: #{tpu_custom_call.1} parent=1 // pred_check
      _
    $region7: #{tpu_custom_call.1} parent=1 // pred_check_branch
      %21 = sbr.rel (0) target = $region9
    $region8: #{tpu_custom_call.1} parent=1 // pred_region
      %22 = dma.done [#allocation3], 1024
    $region9: #{tpu_custom_call.1} parent=1 // pred_fallthru
      _
    %v23 = vld [vmem:[#allocation2] sm:$0xff]
    %v24 = vld [vmem:[#allocation2 + $0x8] sm:$0xff]
    %v25 = vld [vmem:[#allocation2 + $0x10] sm:$0xff]
    %v26 = vld [vmem:[#allocation2 + $0x18] sm:$0xff]
    %v27 = vld [vmem:[#allocation2 + $0x20] sm:$0xff]
    %v28 = vld [vmem:[#allocation2 + $0x28] sm:$0xff]
    %v29 = vld [vmem:[#allocation2 + $0x30] sm:$0xff]
    %v30 = vld [vmem:[#allocation2 + $0x38] sm:$0xff]
    %31 = vmax.xlane.f32.xlu0 %v23
    %v32 = vpop.xlane.xlu0 %31
    %33 = vmax.xlane.f32.xlu0 %v24
    %v34 = vpop.xlane.xlu0 %33
    %35 = vmax.xlane.f32.xlu0 %v25
    %v36 = vpop.xlane.xlu0 %35
    %37 = vmax.xlane.f32.xlu0 %v26
    %v38 = vpop.xlane.xlu0 %37
    %39 = vmax.xlane.f32.xlu0 %v27
    %v40 = vpop.xlane.xlu0 %39
    %41 = vmax.xlane.f32.xlu0 %v28
    %v42 = vpop.xlane.xlu0 %41
    %43 = vmax.xlane.f32.xlu0 %v29
    %v44 = vpop.xlane.xlu0 %43
    %45 = vmax.xlane.f32.xlu0 %v30
    %v46 = vpop.xlane.xlu0 %45
    %v47 = vsub.f32 %v23, %v32
    %v48 = vsub.f32 %v24, %v34
    %v49 = vsub.f32 %v25, %v36
    %v50 = vsub.f32 %v26, %v38
    %v51 = vsub.f32 %v27, %v40
    %v52 = vsub.f32 %v28, %v42
    %v53 = vsub.f32 %v29, %v44
    %v54 = vsub.f32 %v30, %v46
    %v55 = vmul.f32 %v47, 1.442695
    %v56 = vpow.pop %v55
    %v57 = vmul.f32 %v48, 1.442695
    %v58 = vpow.pop %v57
    %v59 = vmul.f32 %v49, 1.442695
    %v60 = vpow.pop %v59
    %v61 = vmul.f32 %v50, 1.442695
    %v62 = vpow.pop %v61
    %v63 = vmul.f32 %v51, 1.442695
    %v64 = vpow.pop %v63
    %v65 = vmul.f32 %v52, 1.442695
    %v66 = vpow.pop %v65
    %v67 = vmul.f32 %v53, 1.442695
    %v68 = vpow.pop %v67
    %v69 = vmul.f32 %v54, 1.442695
    %v70 = vpow.pop %v69
    %71 = vadd.xlane.f32.xlu0 %v56
    %v72 = vpop.xlane.xlu0 %71
    %73 = vadd.xlane.f32.xlu0 %v58
    %v74 = vpop.xlane.xlu0 %73
    %75 = vadd.xlane.f32.xlu0 %v60
    %v76 = vpop.xlane.xlu0 %75
    %77 = vadd.xlane.f32.xlu0 %v62
    %v78 = vpop.xlane.xlu0 %77
    %79 = vadd.xlane.f32.xlu0 %v64
    %v80 = vpop.xlane.xlu0 %79
    %81 = vadd.xlane.f32.xlu0 %v66
    %v82 = vpop.xlane.xlu0 %81
    %83 = vadd.xlane.f32.xlu0 %v68
    %v84 = vpop.xlane.xlu0 %83
    %85 = vadd.xlane.f32.xlu0 %v70
    %v86 = vpop.xlane.xlu0 %85
    %v87 = vlog2.pop %v72
    %v88 = vmul.f32 %v87, 0.6931472
    %v89 = vlog2.pop %v74
    %v90 = vmul.f32 %v89, 0.6931472
    %v91 = vlog2.pop %v76
    %v92 = vmul.f32 %v91, 0.6931472
    %v93 = vlog2.pop %v78
    %v94 = vmul.f32 %v93, 0.6931472
    %v95 = vlog2.pop %v80
    %v96 = vmul.f32 %v95, 0.6931472
    %v97 = vlog2.pop %v82
    %v98 = vmul.f32 %v97, 0.6931472
    %v99 = vlog2.pop %v84
    %v100 = vmul.f32 %v99, 0.6931472
    %v101 = vlog2.pop %v86
    %v102 = vmul.f32 %v101, 0.6931472
    %v103 = vadd.f32 %v32, %v88
    %v104 = vadd.f32 %v34, %v90
    %v105 = vadd.f32 %v36, %v92
    %v106 = vadd.f32 %v38, %v94
    %v107 = vadd.f32 %v40, %v96
    %v108 = vadd.f32 %v42, %v98
    %v109 = vadd.f32 %v44, %v100
    %v110 = vadd.f32 %v46, %v102
    %v111 = vsub.f32 %v23, %v103
    %v112 = vsub.f32 %v24, %v104
    %v113 = vsub.f32 %v25, %v105
    %v114 = vsub.f32 %v26, %v106
    %v115 = vsub.f32 %v27, %v107
    %v116 = vsub.f32 %v28, %v108
    %v117 = vsub.f32 %v29, %v109
    %v118 = vsub.f32 %v30, %v110
    %v119 = vmax.f32 %v111, %v115
    %v120 = vmax.f32 %v112, %v116
    %v121 = vmax.f32 %v113, %v117
    %v122 = vmax.f32 %v114, %v118
    %v123 = vmax.f32 %v119, %v120
    %v124 = vmax.f32 %v121, %v122
    %v125 = vmax.f32 %v123, %v124
    %v126 = vrot.slane %v125, 4
    %v127 = vmax.f32 %v125, %v126
    %v128 = vrot.slane %v127, 2
    %v129 = vmax.f32 %v127, %v128
    %v130 = vrot.slane %v129, 1
    %v131 = vmax.f32 %v129, %v130
    %v132 = vsub.f32 %v111, %v131
    %v133 = vsub.f32 %v112, %v131
    %v134 = vsub.f32 %v113, %v131
    %v135 = vsub.f32 %v114, %v131
    %v136 = vsub.f32 %v115, %v131
    %v137 = vsub.f32 %v116, %v131
    %v138 = vsub.f32 %v117, %v131
    %v139 = vsub.f32 %v118, %v131
    %v140 = vmul.f32 %v132, 1.442695
    %v141 = vpow.pop %v140
    %v142 = vmul.f32 %v133, 1.442695
    %v143 = vpow.pop %v142
    %v144 = vmul.f32 %v134, 1.442695
    %v145 = vpow.pop %v144
    %v146 = vmul.f32 %v135, 1.442695
    %v147 = vpow.pop %v146
    %v148 = vmul.f32 %v136, 1.442695
    %v149 = vpow.pop %v148
    %v150 = vmul.f32 %v137, 1.442695
    %v151 = vpow.pop %v150
    %v152 = vmul.f32 %v138, 1.442695
    %v153 = vpow.pop %v152
    %v154 = vmul.f32 %v139, 1.442695
    %v155 = vpow.pop %v154
    %v156 = vadd.f32 %v141, %v143
    %v157 = vadd.f32 %v156, %v145
    %v158 = vadd.f32 %v157, %v147
    %v159 = vadd.f32 %v158, %v149
    %v160 = vadd.f32 %v159, %v151
    %v161 = vadd.f32 %v160, %v153
    %v162 = vadd.f32 %v161, %v155
    %v163 = vrot.slane %v162, 4
    %v164 = vadd.f32 %v162, %v163
    %v165 = vrot.slane %v164, 2
    %v166 = vadd.f32 %v164, %v165
    %v167 = vrot.slane %v166, 1
    %v168 = vadd.f32 %v166, %v167
    %v169 = vlog2.pop %v168
    %v170 = vmul.f32 %v169, 0.6931472
    %v171 = vadd.f32 %v131, %v170
    %v172 = vsub.f32 %v111, %v171
    %v173 = vsub.f32 %v112, %v171
    %v174 = vsub.f32 %v113, %v171
    %v175 = vsub.f32 %v114, %v171
    %v176 = vsub.f32 %v115, %v171
    %v177 = vsub.f32 %v116, %v171
    %v178 = vsub.f32 %v117, %v171
    %v179 = vsub.f32 %v118, %v171
    %180 = vmax.xlane.f32.xlu0 %v172
    %v181 = vpop.xlane.xlu0 %180
    %182 = vmax.xlane.f32.xlu0 %v173
    %v183 = vpop.xlane.xlu0 %182
    %184 = vmax.xlane.f32.xlu0 %v174
    %v185 = vpop.xlane.xlu0 %184
    %186 = vmax.xlane.f32.xlu0 %v175
    %v187 = vpop.xlane.xlu0 %186
    %188 = vmax.xlane.f32.xlu0 %v176
    %v189 = vpop.xlane.xlu0 %188
    %190 = vmax.xlane.f32.xlu0 %v177
    %v191 = vpop.xlane.xlu0 %190
    %192 = vmax.xlane.f32.xlu0 %v178
    %v193 = vpop.xlane.xlu0 %192
    %194 = vmax.xlane.f32.xlu0 %v179
    %v195 = vpop.xlane.xlu0 %194
    %v196 = vsub.f32 %v172, %v181
    %v197 = vsub.f32 %v173, %v183
    %v198 = vsub.f32 %v174, %v185
    %v199 = vsub.f32 %v175, %v187
    %v200 = vsub.f32 %v176, %v189
    %v201 = vsub.f32 %v177, %v191
    %v202 = vsub.f32 %v178, %v193
    %v203 = vsub.f32 %v179, %v195
    %v204 = vmul.f32 %v196, 1.442695
    %v205 = vpow.pop %v204
    %v206 = vmul.f32 %v197, 1.442695
    %v207 = vpow.pop %v206
    %v208 = vmul.f32 %v198, 1.442695
    %v209 = vpow.pop %v208
    %v210 = vmul.f32 %v199, 1.442695
    %v211 = vpow.pop %v210
    %v212 = vmul.f32 %v200, 1.442695
    %v213 = vpow.pop %v212
    %v214 = vmul.f32 %v201, 1.442695
    %v215 = vpow.pop %v214
    %v216 = vmul.f32 %v202, 1.442695
    %v217 = vpow.pop %v216
    %v218 = vmul.f32 %v203, 1.442695
    %v219 = vpow.pop %v218
    %220 = vadd.xlane.f32.xlu0 %v205
    %v221 = vpop.xlane.xlu0 %220
    %222 = vadd.xlane.f32.xlu0 %v207
    %v223 = vpop.xlane.xlu0 %222
    %224 = vadd.xlane.f32.xlu0 %v209
    %v225 = vpop.xlane.xlu0 %224
    %226 = vadd.xlane.f32.xlu0 %v211
    %v227 = vpop.xlane.xlu0 %226
    %228 = vadd.xlane.f32.xlu0 %v213
    %v229 = vpop.xlane.xlu0 %228
    %230 = vadd.xlane.f32.xlu0 %v215
    %v231 = vpop.xlane.xlu0 %230
    %232 = vadd.xlane.f32.xlu0 %v217
    %v233 = vpop.xlane.xlu0 %232
    %234 = vadd.xlane.f32.xlu0 %v219
    %v235 = vpop.xlane.xlu0 %234
    %v236 = vlog2.pop %v221
    %v237 = vmul.f32 %v236, 0.6931472
    %v238 = vlog2.pop %v223
    %v239 = vmul.f32 %v238, 0.6931472
    %v240 = vlog2.pop %v225
    %v241 = vmul.f32 %v240, 0.6931472
    %v242 = vlog2.pop %v227
    %v243 = vmul.f32 %v242, 0.6931472
    %v244 = vlog2.pop %v229
    %v245 = vmul.f32 %v244, 0.6931472
    %v246 = vlog2.pop %v231
    %v247 = vmul.f32 %v246, 0.6931472
    %v248 = vlog2.pop %v233
    %v249 = vmul.f32 %v248, 0.6931472
    %v250 = vlog2.pop %v235
    %v251 = vmul.f32 %v250, 0.6931472
    %v252 = vadd.f32 %v181, %v237
    %v253 = vadd.f32 %v183, %v239
    %v254 = vadd.f32 %v185, %v241
    %v255 = vadd.f32 %v187, %v243
    %v256 = vadd.f32 %v189, %v245
    %v257 = vadd.f32 %v191, %v247
    %v258 = vadd.f32 %v193, %v249
    %v259 = vadd.f32 %v195, %v251
    %v260 = vsub.f32 %v172, %v252
    %v261 = vsub.f32 %v173, %v253
    %v262 = vsub.f32 %v174, %v254
    %v263 = vsub.f32 %v175, %v255
    %v264 = vsub.f32 %v176, %v256
    %v265 = vsub.f32 %v177, %v257
    %v266 = vsub.f32 %v178, %v258
    %v267 = vsub.f32 %v179, %v259
    %v268 = vmax.f32 %v260, %v264
    %v269 = vmax.f32 %v261, %v265
    %v270 = vmax.f32 %v262, %v266
    %v271 = vmax.f32 %v263, %v267
    %v272 = vmax.f32 %v268, %v269
    %v273 = vmax.f32 %v270, %v271
    %v274 = vmax.f32 %v272, %v273
    %v275 = vrot.slane %v274, 4
    %v276 = vmax.f32 %v274, %v275
    %v277 = vrot.slane %v276, 2
    %v278 = vmax.f32 %v276, %v277
    %v279 = vrot.slane %v278, 1
    %v280 = vmax.f32 %v278, %v279
    %v281 = vsub.f32 %v260, %v280
    %v282 = vsub.f32 %v261, %v280
    %v283 = vsub.f32 %v262, %v280
    %v284 = vsub.f32 %v263, %v280
    %v285 = vsub.f32 %v264, %v280
    %v286 = vsub.f32 %v265, %v280
    %v287 = vsub.f32 %v266, %v280
    %v288 = vsub.f32 %v267, %v280
    %v289 = vmul.f32 %v281, 1.442695
    %v290 = vpow.pop %v289
    %v291 = vmul.f32 %v282, 1.442695
    %v292 = vpow.pop %v291
    %v293 = vmul.f32 %v283, 1.442695
    %v294 = vpow.pop %v293
    %v295 = vmul.f32 %v284, 1.442695
    %v296 = vpow.pop %v295
    %v297 = vmul.f32 %v285, 1.442695
    %v298 = vpow.pop %v297
    %v299 = vmul.f32 %v286, 1.442695
    %v300 = vpow.pop %v299
    %v301 = vmul.f32 %v287, 1.442695
    %v302 = vpow.pop %v301
    %v303 = vmul.f32 %v288, 1.442695
    %v304 = vpow.pop %v303
    %v305 = vadd.f32 %v290, %v292
    %v306 = vadd.f32 %v305, %v294
    %v307 = vadd.f32 %v306, %v296
    %v308 = vadd.f32 %v307, %v298
    %v309 = vadd.f32 %v308, %v300
    %v310 = vadd.f32 %v309, %v302
    %v311 = vadd.f32 %v310, %v304
    %v312 = vrot.slane %v311, 4
    %v313 = vadd.f32 %v311, %v312
    %v314 = vrot.slane %v313, 2
    %v315 = vadd.f32 %v313, %v314
    %v316 = vrot.slane %v315, 1
    %v317 = vadd.f32 %v315, %v316
    %v318 = vlog2.pop %v317
    %v319 = vmul.f32 %v318, 0.6931472
    %v320 = vadd.f32 %v280, %v319
    %v321 = vsub.f32 %v260, %v320
    %v322 = vsub.f32 %v261, %v320
    %v323 = vsub.f32 %v262, %v320
    %v324 = vsub.f32 %v263, %v320
    %v325 = vsub.f32 %v264, %v320
    %v326 = vsub.f32 %v265, %v320
    %v327 = vsub.f32 %v266, %v320
    %v328 = vsub.f32 %v267, %v320
    %329 = vmax.xlane.f32.xlu0 %v321
    %v330 = vpop.xlane.xlu0 %329
    %331 = vmax.xlane.f32.xlu0 %v322
    %v332 = vpop.xlane.xlu0 %331
    %333 = vmax.xlane.f32.xlu0 %v323
    %v334 = vpop.xlane.xlu0 %333
    %335 = vmax.xlane.f32.xlu0 %v324
    %v336 = vpop.xlane.xlu0 %335
    %337 = vmax.xlane.f32.xlu0 %v325
    %v338 = vpop.xlane.xlu0 %337
    %339 = vmax.xlane.f32.xlu0 %v326
    %v340 = vpop.xlane.xlu0 %339
    %341 = vmax.xlane.f32.xlu0 %v327
    %v342 = vpop.xlane.xlu0 %341
    %343 = vmax.xlane.f32.xlu0 %v328
    %v344 = vpop.xlane.xlu0 %343
    %v345 = vsub.f32 %v321, %v330
    %v346 = vsub.f32 %v322, %v332
    %v347 = vsub.f32 %v323, %v334
    %v348 = vsub.f32 %v324, %v336
    %v349 = vsub.f32 %v325, %v338
    %v350 = vsub.f32 %v326, %v340
    %v351 = vsub.f32 %v327, %v342
    %v352 = vsub.f32 %v328, %v344
    %v353 = vmul.f32 %v345, 1.442695
    %v354 = vpow.pop %v353
    %v355 = vmul.f32 %v346, 1.442695
    %v356 = vpow.pop %v355
    %v357 = vmul.f32 %v347, 1.442695
    %v358 = vpow.pop %v357
    %v359 = vmul.f32 %v348, 1.442695
    %v360 = vpow.pop %v359
    %v361 = vmul.f32 %v349, 1.442695
    %v362 = vpow.pop %v361
    %v363 = vmul.f32 %v350, 1.442695
    %v364 = vpow.pop %v363
    %v365 = vmul.f32 %v351, 1.442695
    %v366 = vpow.pop %v365
    %v367 = vmul.f32 %v352, 1.442695
    %v368 = vpow.pop %v367
    %369 = vadd.xlane.f32.xlu0 %v354
    %v370 = vpop.xlane.xlu0 %369
    %371 = vadd.xlane.f32.xlu0 %v356
    %v372 = vpop.xlane.xlu0 %371
    %373 = vadd.xlane.f32.xlu0 %v358
    %v374 = vpop.xlane.xlu0 %373
    %375 = vadd.xlane.f32.xlu0 %v360
    %v376 = vpop.xlane.xlu0 %375
    %377 = vadd.xlane.f32.xlu0 %v362
    %v378 = vpop.xlane.xlu0 %377
    %379 = vadd.xlane.f32.xlu0 %v364
    %v380 = vpop.xlane.xlu0 %379
    %381 = vadd.xlane.f32.xlu0 %v366
    %v382 = vpop.xlane.xlu0 %381
    %383 = vadd.xlane.f32.xlu0 %v368
    %v384 = vpop.xlane.xlu0 %383
    %v385 = vlog2.pop %v370
    %v386 = vmul.f32 %v385, 0.6931472
    %v387 = vlog2.pop %v372
    %v388 = vmul.f32 %v387, 0.6931472
    %v389 = vlog2.pop %v374
    %v390 = vmul.f32 %v389, 0.6931472
    %v391 = vlog2.pop %v376
    %v392 = vmul.f32 %v391, 0.6931472
    %v393 = vlog2.pop %v378
    %v394 = vmul.f32 %v393, 0.6931472
    %v395 = vlog2.pop %v380
    %v396 = vmul.f32 %v395, 0.6931472
    %v397 = vlog2.pop %v382
    %v398 = vmul.f32 %v397, 0.6931472
    %v399 = vlog2.pop %v384
    %v400 = vmul.f32 %v399, 0.6931472
    %v401 = vadd.f32 %v330, %v386
    %v402 = vadd.f32 %v332, %v388
    %v403 = vadd.f32 %v334, %v390
    %v404 = vadd.f32 %v336, %v392
    %v405 = vadd.f32 %v338, %v394
    %v406 = vadd.f32 %v340, %v396
    %v407 = vadd.f32 %v342, %v398
    %v408 = vadd.f32 %v344, %v400
    %v409 = vsub.f32 %v321, %v401
    %v410 = vsub.f32 %v322, %v402
    %v411 = vsub.f32 %v323, %v403
    %v412 = vsub.f32 %v324, %v404
    %v413 = vsub.f32 %v325, %v405
    %v414 = vsub.f32 %v326, %v406
    %v415 = vsub.f32 %v327, %v407
    %v416 = vsub.f32 %v328, %v408
    %v417 = vmax.f32 %v409, %v413
    %v418 = vmax.f32 %v410, %v414
    %v419 = vmax.f32 %v411, %v415
    %v420 = vmax.f32 %v412, %v416
    %v421 = vmax.f32 %v417, %v418
    %v422 = vmax.f32 %v419, %v420
    %v423 = vmax.f32 %v421, %v422
    %v424 = vrot.slane %v423, 4
    %v425 = vmax.f32 %v423, %v424
    %v426 = vrot.slane %v425, 2
    %v427 = vmax.f32 %v425, %v426
    %v428 = vrot.slane %v427, 1
    %v429 = vmax.f32 %v427, %v428
    %v430 = vsub.f32 %v409, %v429
    %v431 = vsub.f32 %v410, %v429
    %v432 = vsub.f32 %v411, %v429
    %v433 = vsub.f32 %v412, %v429
    %v434 = vsub.f32 %v413, %v429
    %v435 = vsub.f32 %v414, %v429
    %v436 = vsub.f32 %v415, %v429
    %v437 = vsub.f32 %v416, %v429
    %v438 = vmul.f32 %v430, 1.442695
    %v439 = vpow.pop %v438
    %v440 = vmul.f32 %v431, 1.442695
    %v441 = vpow.pop %v440
    %v442 = vmul.f32 %v432, 1.442695
    %v443 = vpow.pop %v442
    %v444 = vmul.f32 %v433, 1.442695
    %v445 = vpow.pop %v444
    %v446 = vmul.f32 %v434, 1.442695
    %v447 = vpow.pop %v446
    %v448 = vmul.f32 %v435, 1.442695
    %v449 = vpow.pop %v448
    %v450 = vmul.f32 %v436, 1.442695
    %v451 = vpow.pop %v450
    %v452 = vmul.f32 %v437, 1.442695
    %v453 = vpow.pop %v452
    %v454 = vadd.f32 %v439, %v441
    %v455 = vadd.f32 %v454, %v443
    %v456 = vadd.f32 %v455, %v445
    %v457 = vadd.f32 %v456, %v447
    %v458 = vadd.f32 %v457, %v449
    %v459 = vadd.f32 %v458, %v451
    %v460 = vadd.f32 %v459, %v453
    %v461 = vrot.slane %v460, 4
    %v462 = vadd.f32 %v460, %v461
    %v463 = vrot.slane %v462, 2
    %v464 = vadd.f32 %v462, %v463
    %v465 = vrot.slane %v464, 1
    %v466 = vadd.f32 %v464, %v465
    %v467 = vlog2.pop %v466
    %v468 = vmul.f32 %v467, 0.6931472
    %v469 = vadd.f32 %v429, %v468
    %v470 = vsub.f32 %v409, %v469
    %v471 = vsub.f32 %v410, %v469
    %v472 = vsub.f32 %v411, %v469
    %v473 = vsub.f32 %v412, %v469
    %v474 = vsub.f32 %v413, %v469
    %v475 = vsub.f32 %v414, %v469
    %v476 = vsub.f32 %v415, %v469
    %v477 = vsub.f32 %v416, %v469
    %478 = vmax.xlane.f32.xlu0 %v470
    %v479 = vpop.xlane.xlu0 %478
    %480 = vmax.xlane.f32.xlu0 %v471
    %v481 = vpop.xlane.xlu0 %480
    %482 = vmax.xlane.f32.xlu0 %v472
    %v483 = vpop.xlane.xlu0 %482
    %484 = vmax.xlane.f32.xlu0 %v473
    %v485 = vpop.xlane.xlu0 %484
    %486 = vmax.xlane.f32.xlu0 %v474
    %v487 = vpop.xlane.xlu0 %486
    %488 = vmax.xlane.f32.xlu0 %v475
    %v489 = vpop.xlane.xlu0 %488
    %490 = vmax.xlane.f32.xlu0 %v476
    %v491 = vpop.xlane.xlu0 %490
    %492 = vmax.xlane.f32.xlu0 %v477
    %v493 = vpop.xlane.xlu0 %492
    %v494 = vsub.f32 %v470, %v479
    %v495 = vsub.f32 %v471, %v481
    %v496 = vsub.f32 %v472, %v483
    %v497 = vsub.f32 %v473, %v485
    %v498 = vsub.f32 %v474, %v487
    %v499 = vsub.f32 %v475, %v489
    %v500 = vsub.f32 %v476, %v491
    %v501 = vsub.f32 %v477, %v493
    %v502 = vmul.f32 %v494, 1.442695
    %v503 = vpow.pop %v502
    %v504 = vmul.f32 %v495, 1.442695
    %v505 = vpow.pop %v504
    %v506 = vmul.f32 %v496, 1.442695
    %v507 = vpow.pop %v506
    %v508 = vmul.f32 %v497, 1.442695
    %v509 = vpow.pop %v508
    %v510 = vmul.f32 %v498, 1.442695
    %v511 = vpow.pop %v510
    %v512 = vmul.f32 %v499, 1.442695
    %v513 = vpow.pop %v512
    %v514 = vmul.f32 %v500, 1.442695
    %v515 = vpow.pop %v514
    %v516 = vmul.f32 %v501, 1.442695
    %v517 = vpow.pop %v516
    %518 = vadd.xlane.f32.xlu0 %v503
    %v519 = vpop.xlane.xlu0 %518
    %520 = vadd.xlane.f32.xlu0 %v505
    %v521 = vpop.xlane.xlu0 %520
    %522 = vadd.xlane.f32.xlu0 %v507
    %v523 = vpop.xlane.xlu0 %522
    %524 = vadd.xlane.f32.xlu0 %v509
    %v525 = vpop.xlane.xlu0 %524
    %526 = vadd.xlane.f32.xlu0 %v511
    %v527 = vpop.xlane.xlu0 %526
    %528 = vadd.xlane.f32.xlu0 %v513
    %v529 = vpop.xlane.xlu0 %528
    %530 = vadd.xlane.f32.xlu0 %v515
    %v531 = vpop.xlane.xlu0 %530
    %532 = vadd.xlane.f32.xlu0 %v517
    %v533 = vpop.xlane.xlu0 %532
    %v534 = vlog2.pop %v519
    %v535 = vmul.f32 %v534, 0.6931472
    %v536 = vlog2.pop %v521
    %v537 = vmul.f32 %v536, 0.6931472
    %v538 = vlog2.pop %v523
    %v539 = vmul.f32 %v538, 0.6931472
    %v540 = vlog2.pop %v525
    %v541 = vmul.f32 %v540, 0.6931472
    %v542 = vlog2.pop %v527
    %v543 = vmul.f32 %v542, 0.6931472
    %v544 = vlog2.pop %v529
    %v545 = vmul.f32 %v544, 0.6931472
    %v546 = vlog2.pop %v531
    %v547 = vmul.f32 %v546, 0.6931472
    %v548 = vlog2.pop %v533
    %v549 = vmul.f32 %v548, 0.6931472
    %v550 = vadd.f32 %v479, %v535
    %v551 = vadd.f32 %v481, %v537
    %v552 = vadd.f32 %v483, %v539
    %v553 = vadd.f32 %v485, %v541
    %v554 = vadd.f32 %v487, %v543
    %v555 = vadd.f32 %v489, %v545
    %v556 = vadd.f32 %v491, %v547
    %v557 = vadd.f32 %v493, %v549
    %v558 = vsub.f32 %v470, %v550
    %v559 = vsub.f32 %v471, %v551
    %v560 = vsub.f32 %v472, %v552
    %v561 = vsub.f32 %v473, %v553
    %v562 = vsub.f32 %v474, %v554
    %v563 = vsub.f32 %v475, %v555
    %v564 = vsub.f32 %v476, %v556
    %v565 = vsub.f32 %v477, %v557
    %v566 = vmax.f32 %v558, %v562
    %v567 = vmax.f32 %v559, %v563
    %v568 = vmax.f32 %v560, %v564
    %v569 = vmax.f32 %v561, %v565
    %v570 = vmax.f32 %v566, %v567
    %v571 = vmax.f32 %v568, %v569
    %v572 = vmax.f32 %v570, %v571
    %v573 = vrot.slane %v572, 4
    %v574 = vmax.f32 %v572, %v573
    %v575 = vrot.slane %v574, 2
    %v576 = vmax.f32 %v574, %v575
    %v577 = vrot.slane %v576, 1
    %v578 = vmax.f32 %v576, %v577
    %v579 = vsub.f32 %v558, %v578
    %v580 = vsub.f32 %v559, %v578
    %v581 = vsub.f32 %v560, %v578
    %v582 = vsub.f32 %v561, %v578
    %v583 = vsub.f32 %v562, %v578
    %v584 = vsub.f32 %v563, %v578
    %v585 = vsub.f32 %v564, %v578
    %v586 = vsub.f32 %v565, %v578
    %v587 = vmul.f32 %v579, 1.442695
    %v588 = vpow.pop %v587
    %v589 = vmul.f32 %v580, 1.442695
    %v590 = vpow.pop %v589
    %v591 = vmul.f32 %v581, 1.442695
    %v592 = vpow.pop %v591
    %v593 = vmul.f32 %v582, 1.442695
    %v594 = vpow.pop %v593
    %v595 = vmul.f32 %v583, 1.442695
    %v596 = vpow.pop %v595
    %v597 = vmul.f32 %v584, 1.442695
    %v598 = vpow.pop %v597
    %v599 = vmul.f32 %v585, 1.442695
    %v600 = vpow.pop %v599
    %v601 = vmul.f32 %v586, 1.442695
    %v602 = vpow.pop %v601
    %v603 = vadd.f32 %v588, %v590
    %v604 = vadd.f32 %v603, %v592
    %v605 = vadd.f32 %v604, %v594
    %v606 = vadd.f32 %v605, %v596
    %v607 = vadd.f32 %v606, %v598
    %v608 = vadd.f32 %v607, %v600
    %v609 = vadd.f32 %v608, %v602
    %v610 = vrot.slane %v609, 4
    %v611 = vadd.f32 %v609, %v610
    %v612 = vrot.slane %v611, 2
    %v613 = vadd.f32 %v611, %v612
    %v614 = vrot.slane %v613, 1
    %v615 = vadd.f32 %v613, %v614
    %v616 = vlog2.pop %v615
    %v617 = vmul.f32 %v616, 0.6931472
    %v618 = vadd.f32 %v578, %v617
    %v619 = vsub.f32 %v558, %v618
    %v620 = vsub.f32 %v559, %v618
    %v621 = vsub.f32 %v560, %v618
    %v622 = vsub.f32 %v561, %v618
    %v623 = vsub.f32 %v562, %v618
    %v624 = vsub.f32 %v563, %v618
    %v625 = vsub.f32 %v564, %v618
    %v626 = vsub.f32 %v565, %v618
    %627 = vmax.xlane.f32.xlu0 %v619
    %v628 = vpop.xlane.xlu0 %627
    %629 = vmax.xlane.f32.xlu0 %v620
    %v630 = vpop.xlane.xlu0 %629
    %631 = vmax.xlane.f32.xlu0 %v621
    %v632 = vpop.xlane.xlu0 %631
    %633 = vmax.xlane.f32.xlu0 %v622
    %v634 = vpop.xlane.xlu0 %633
    %635 = vmax.xlane.f32.xlu0 %v623
    %v636 = vpop.xlane.xlu0 %635
    %637 = vmax.xlane.f32.xlu0 %v624
    %v638 = vpop.xlane.xlu0 %637
    %639 = vmax.xlane.f32.xlu0 %v625
    %v640 = vpop.xlane.xlu0 %639
    %641 = vmax.xlane.f32.xlu0 %v626
    %v642 = vpop.xlane.xlu0 %641
    %v643 = vsub.f32 %v619, %v628
    %v644 = vsub.f32 %v620, %v630
    %v645 = vsub.f32 %v621, %v632
    %v646 = vsub.f32 %v622, %v634
    %v647 = vsub.f32 %v623, %v636
    %v648 = vsub.f32 %v624, %v638
    %v649 = vsub.f32 %v625, %v640
    %v650 = vsub.f32 %v626, %v642
    %v651 = vmul.f32 %v643, 1.442695
    %v652 = vpow.pop %v651
    %v653 = vmul.f32 %v644, 1.442695
    %v654 = vpow.pop %v653
    %v655 = vmul.f32 %v645, 1.442695
    %v656 = vpow.pop %v655
    %v657 = vmul.f32 %v646, 1.442695
    %v658 = vpow.pop %v657
    %v659 = vmul.f32 %v647, 1.442695
    %v660 = vpow.pop %v659
    %v661 = vmul.f32 %v648, 1.442695
    %v662 = vpow.pop %v661
    %v663 = vmul.f32 %v649, 1.442695
    %v664 = vpow.pop %v663
    %v665 = vmul.f32 %v650, 1.442695
    %v666 = vpow.pop %v665
    %667 = vadd.xlane.f32.xlu0 %v652
    %v668 = vpop.xlane.xlu0 %667
    %669 = vadd.xlane.f32.xlu0 %v654
    %v670 = vpop.xlane.xlu0 %669
    %671 = vadd.xlane.f32.xlu0 %v656
    %v672 = vpop.xlane.xlu0 %671
    %673 = vadd.xlane.f32.xlu0 %v658
    %v674 = vpop.xlane.xlu0 %673
    %675 = vadd.xlane.f32.xlu0 %v660
    %v676 = vpop.xlane.xlu0 %675
    %677 = vadd.xlane.f32.xlu0 %v662
    %v678 = vpop.xlane.xlu0 %677
    %679 = vadd.xlane.f32.xlu0 %v664
    %v680 = vpop.xlane.xlu0 %679
    %681 = vadd.xlane.f32.xlu0 %v666
    %v682 = vpop.xlane.xlu0 %681
    %v683 = vlog2.pop %v668
    %v684 = vmul.f32 %v683, 0.6931472
    %v685 = vlog2.pop %v670
    %v686 = vmul.f32 %v685, 0.6931472
    %v687 = vlog2.pop %v672
    %v688 = vmul.f32 %v687, 0.6931472
    %v689 = vlog2.pop %v674
    %v690 = vmul.f32 %v689, 0.6931472
    %v691 = vlog2.pop %v676
    %v692 = vmul.f32 %v691, 0.6931472
    %v693 = vlog2.pop %v678
    %v694 = vmul.f32 %v693, 0.6931472
    %v695 = vlog2.pop %v680
    %v696 = vmul.f32 %v695, 0.6931472
    %v697 = vlog2.pop %v682
    %v698 = vmul.f32 %v697, 0.6931472
    %v699 = vadd.f32 %v628, %v684
    %v700 = vadd.f32 %v630, %v686
    %v701 = vadd.f32 %v632, %v688
    %v702 = vadd.f32 %v634, %v690
    %v703 = vadd.f32 %v636, %v692
    %v704 = vadd.f32 %v638, %v694
    %v705 = vadd.f32 %v640, %v696
    %v706 = vadd.f32 %v642, %v698
    %v707 = vsub.f32 %v619, %v699
    %v708 = vsub.f32 %v620, %v700
    %v709 = vsub.f32 %v621, %v701
    %v710 = vsub.f32 %v622, %v702
    %v711 = vsub.f32 %v623, %v703
    %v712 = vsub.f32 %v624, %v704
    %v713 = vsub.f32 %v625, %v705
    %v714 = vsub.f32 %v626, %v706
    %v715 = vmax.f32 %v707, %v711
    %v716 = vmax.f32 %v708, %v712
    %v717 = vmax.f32 %v709, %v713
    %v718 = vmax.f32 %v710, %v714
    %v719 = vmax.f32 %v715, %v716
    %v720 = vmax.f32 %v717, %v718
    %v721 = vmax.f32 %v719, %v720
    %v722 = vrot.slane %v721, 4
    %v723 = vmax.f32 %v721, %v722
    %v724 = vrot.slane %v723, 2
    %v725 = vmax.f32 %v723, %v724
    %v726 = vrot.slane %v725, 1
    %v727 = vmax.f32 %v725, %v726
    %v728 = vsub.f32 %v707, %v727
    %v729 = vsub.f32 %v708, %v727
    %v730 = vsub.f32 %v709, %v727
    %v731 = vsub.f32 %v710, %v727
    %v732 = vsub.f32 %v711, %v727
    %v733 = vsub.f32 %v712, %v727
    %v734 = vsub.f32 %v713, %v727
    %v735 = vsub.f32 %v714, %v727
    %v736 = vmul.f32 %v728, 1.442695
    %v737 = vpow.pop %v736
    %v738 = vmul.f32 %v729, 1.442695
    %v739 = vpow.pop %v738
    %v740 = vmul.f32 %v730, 1.442695
    %v741 = vpow.pop %v740
    %v742 = vmul.f32 %v731, 1.442695
    %v743 = vpow.pop %v742
    %v744 = vmul.f32 %v732, 1.442695
    %v745 = vpow.pop %v744
    %v746 = vmul.f32 %v733, 1.442695
    %v747 = vpow.pop %v746
    %v748 = vmul.f32 %v734, 1.442695
    %v749 = vpow.pop %v748
    %v750 = vmul.f32 %v735, 1.442695
    %v751 = vpow.pop %v750
    %v752 = vadd.f32 %v737, %v739
    %v753 = vadd.f32 %v752, %v741
    %v754 = vadd.f32 %v753, %v743
    %v755 = vadd.f32 %v754, %v745
    %v756 = vadd.f32 %v755, %v747
    %v757 = vadd.f32 %v756, %v749
    %v758 = vadd.f32 %v757, %v751
    %v759 = vrot.slane %v758, 4
    %v760 = vadd.f32 %v758, %v759
    %v761 = vrot.slane %v760, 2
    %v762 = vadd.f32 %v760, %v761
    %v763 = vrot.slane %v762, 1
    %v764 = vadd.f32 %v762, %v763
    %v765 = vlog2.pop %v764
    %v766 = vmul.f32 %v765, 0.6931472
    %v767 = vadd.f32 %v727, %v766
    %v768 = vsub.f32 %v707, %v767
    %v769 = vsub.f32 %v708, %v767
    %v770 = vsub.f32 %v709, %v767
    %v771 = vsub.f32 %v710, %v767
    %v772 = vsub.f32 %v711, %v767
    %v773 = vsub.f32 %v712, %v767
    %v774 = vsub.f32 %v713, %v767
    %v775 = vsub.f32 %v714, %v767
    %776 = vmax.xlane.f32.xlu0 %v768
    %v777 = vpop.xlane.xlu0 %776
    %778 = vmax.xlane.f32.xlu0 %v769
    %v779 = vpop.xlane.xlu0 %778
    %780 = vmax.xlane.f32.xlu0 %v770
    %v781 = vpop.xlane.xlu0 %780
    %782 = vmax.xlane.f32.xlu0 %v771
    %v783 = vpop.xlane.xlu0 %782
    %784 = vmax.xlane.f32.xlu0 %v772
    %v785 = vpop.xlane.xlu0 %784
    %786 = vmax.xlane.f32.xlu0 %v773
    %v787 = vpop.xlane.xlu0 %786
    %788 = vmax.xlane.f32.xlu0 %v774
    %v789 = vpop.xlane.xlu0 %788
    %790 = vmax.xlane.f32.xlu0 %v775
    %v791 = vpop.xlane.xlu0 %790
    %v792 = vsub.f32 %v768, %v777
    %v793 = vsub.f32 %v769, %v779
    %v794 = vsub.f32 %v770, %v781
    %v795 = vsub.f32 %v771, %v783
    %v796 = vsub.f32 %v772, %v785
    %v797 = vsub.f32 %v773, %v787
    %v798 = vsub.f32 %v774, %v789
    %v799 = vsub.f32 %v775, %v791
    %v800 = vmul.f32 %v792, 1.442695
    %v801 = vpow.pop %v800
    %v802 = vmul.f32 %v793, 1.442695
    %v803 = vpow.pop %v802
    %v804 = vmul.f32 %v794, 1.442695
    %v805 = vpow.pop %v804
    %v806 = vmul.f32 %v795, 1.442695
    %v807 = vpow.pop %v806
    %v808 = vmul.f32 %v796, 1.442695
    %v809 = vpow.pop %v808
    %v810 = vmul.f32 %v797, 1.442695
    %v811 = vpow.pop %v810
    %v812 = vmul.f32 %v798, 1.442695
    %v813 = vpow.pop %v812
    %v814 = vmul.f32 %v799, 1.442695
    %v815 = vpow.pop %v814
    %816 = vadd.xlane.f32.xlu0 %v801
    %v817 = vpop.xlane.xlu0 %816
    %818 = vadd.xlane.f32.xlu0 %v803
    %v819 = vpop.xlane.xlu0 %818
    %820 = vadd.xlane.f32.xlu0 %v805
    %v821 = vpop.xlane.xlu0 %820
    %822 = vadd.xlane.f32.xlu0 %v807
    %v823 = vpop.xlane.xlu0 %822
    %824 = vadd.xlane.f32.xlu0 %v809
    %v825 = vpop.xlane.xlu0 %824
    %826 = vadd.xlane.f32.xlu0 %v811
    %v827 = vpop.xlane.xlu0 %826
    %828 = vadd.xlane.f32.xlu0 %v813
    %v829 = vpop.xlane.xlu0 %828
    %830 = vadd.xlane.f32.xlu0 %v815
    %v831 = vpop.xlane.xlu0 %830
    %v832 = vlog2.pop %v817
    %v833 = vmul.f32 %v832, 0.6931472
    %v834 = vlog2.pop %v819
    %v835 = vmul.f32 %v834, 0.6931472
    %v836 = vlog2.pop %v821
    %v837 = vmul.f32 %v836, 0.6931472
    %v838 = vlog2.pop %v823
    %v839 = vmul.f32 %v838, 0.6931472
    %v840 = vlog2.pop %v825
    %v841 = vmul.f32 %v840, 0.6931472
    %v842 = vlog2.pop %v827
    %v843 = vmul.f32 %v842, 0.6931472
    %v844 = vlog2.pop %v829
    %v845 = vmul.f32 %v844, 0.6931472
    %v846 = vlog2.pop %v831
    %v847 = vmul.f32 %v846, 0.6931472
    %v848 = vadd.f32 %v777, %v833
    %v849 = vadd.f32 %v779, %v835
    %v850 = vadd.f32 %v781, %v837
    %v851 = vadd.f32 %v783, %v839
    %v852 = vadd.f32 %v785, %v841
    %v853 = vadd.f32 %v787, %v843
    %v854 = vadd.f32 %v789, %v845
    %v855 = vadd.f32 %v791, %v847
    %v856 = vsub.f32 %v768, %v848
    %v857 = vsub.f32 %v769, %v849
    %v858 = vsub.f32 %v770, %v850
    %v859 = vsub.f32 %v771, %v851
    %v860 = vsub.f32 %v772, %v852
    %v861 = vsub.f32 %v773, %v853
    %v862 = vsub.f32 %v774, %v854
    %v863 = vsub.f32 %v775, %v855
    %v864 = vmax.f32 %v856, %v860
    %v865 = vmax.f32 %v857, %v861
    %v866 = vmax.f32 %v858, %v862
    %v867 = vmax.f32 %v859, %v863
    %v868 = vmax.f32 %v864, %v865
    %v869 = vmax.f32 %v866, %v867
    %v870 = vmax.f32 %v868, %v869
    %v871 = vrot.slane %v870, 4
    %v872 = vmax.f32 %v870, %v871
    %v873 = vrot.slane %v872, 2
    %v874 = vmax.f32 %v872, %v873
    %v875 = vrot.slane %v874, 1
    %v876 = vmax.f32 %v874, %v875
    %v877 = vsub.f32 %v856, %v876
    %v878 = vsub.f32 %v857, %v876
    %v879 = vsub.f32 %v858, %v876
    %v880 = vsub.f32 %v859, %v876
    %v881 = vsub.f32 %v860, %v876
    %v882 = vsub.f32 %v861, %v876
    %v883 = vsub.f32 %v862, %v876
    %v884 = vsub.f32 %v863, %v876
    %v885 = vmul.f32 %v877, 1.442695
    %v886 = vpow.pop %v885
    %v887 = vmul.f32 %v878, 1.442695
    %v888 = vpow.pop %v887
    %v889 = vmul.f32 %v879, 1.442695
    %v890 = vpow.pop %v889
    %v891 = vmul.f32 %v880, 1.442695
    %v892 = vpow.pop %v891
    %v893 = vmul.f32 %v881, 1.442695
    %v894 = vpow.pop %v893
    %v895 = vmul.f32 %v882, 1.442695
    %v896 = vpow.pop %v895
    %v897 = vmul.f32 %v883, 1.442695
    %v898 = vpow.pop %v897
    %v899 = vmul.f32 %v884, 1.442695
    %v900 = vpow.pop %v899
    %v901 = vadd.f32 %v886, %v888
    %v902 = vadd.f32 %v901, %v890
    %v903 = vadd.f32 %v902, %v892
    %v904 = vadd.f32 %v903, %v894
    %v905 = vadd.f32 %v904, %v896
    %v906 = vadd.f32 %v905, %v898
    %v907 = vadd.f32 %v906, %v900
    %v908 = vrot.slane %v907, 4
    %v909 = vadd.f32 %v907, %v908
    %v910 = vrot.slane %v909, 2
    %v911 = vadd.f32 %v909, %v910
    %v912 = vrot.slane %v911, 1
    %v913 = vadd.f32 %v911, %v912
    %v914 = vlog2.pop %v913
    %v915 = vmul.f32 %v914, 0.6931472
    %v916 = vadd.f32 %v876, %v915
    %v917 = vsub.f32 %v856, %v916
    %v918 = vsub.f32 %v857, %v916
    %v919 = vsub.f32 %v858, %v916
    %v920 = vsub.f32 %v859, %v916
    %v921 = vsub.f32 %v860, %v916
    %v922 = vsub.f32 %v861, %v916
    %v923 = vsub.f32 %v862, %v916
    %v924 = vsub.f32 %v863, %v916
    %925 = vmax.xlane.f32.xlu0 %v917
    %v926 = vpop.xlane.xlu0 %925
    %927 = vmax.xlane.f32.xlu0 %v918
    %v928 = vpop.xlane.xlu0 %927
    %929 = vmax.xlane.f32.xlu0 %v919
    %v930 = vpop.xlane.xlu0 %929
    %931 = vmax.xlane.f32.xlu0 %v920
    %v932 = vpop.xlane.xlu0 %931
    %933 = vmax.xlane.f32.xlu0 %v921
    %v934 = vpop.xlane.xlu0 %933
    %935 = vmax.xlane.f32.xlu0 %v922
    %v936 = vpop.xlane.xlu0 %935
    %937 = vmax.xlane.f32.xlu0 %v923
    %v938 = vpop.xlane.xlu0 %937
    %939 = vmax.xlane.f32.xlu0 %v924
    %v940 = vpop.xlane.xlu0 %939
    %v941 = vsub.f32 %v917, %v926
    %v942 = vsub.f32 %v918, %v928
    %v943 = vsub.f32 %v919, %v930
    %v944 = vsub.f32 %v920, %v932
    %v945 = vsub.f32 %v921, %v934
    %v946 = vsub.f32 %v922, %v936
    %v947 = vsub.f32 %v923, %v938
    %v948 = vsub.f32 %v924, %v940
    %v949 = vmul.f32 %v941, 1.442695
    %v950 = vpow.pop %v949
    %v951 = vmul.f32 %v942, 1.442695
    %v952 = vpow.pop %v951
    %v953 = vmul.f32 %v943, 1.442695
    %v954 = vpow.pop %v953
    %v955 = vmul.f32 %v944, 1.442695
    %v956 = vpow.pop %v955
    %v957 = vmul.f32 %v945, 1.442695
    %v958 = vpow.pop %v957
    %v959 = vmul.f32 %v946, 1.442695
    %v960 = vpow.pop %v959
    %v961 = vmul.f32 %v947, 1.442695
    %v962 = vpow.pop %v961
    %v963 = vmul.f32 %v948, 1.442695
    %v964 = vpow.pop %v963
    %965 = vadd.xlane.f32.xlu0 %v950
    %v966 = vpop.xlane.xlu0 %965
    %967 = vadd.xlane.f32.xlu0 %v952
    %v968 = vpop.xlane.xlu0 %967
    %969 = vadd.xlane.f32.xlu0 %v954
    %v970 = vpop.xlane.xlu0 %969
    %971 = vadd.xlane.f32.xlu0 %v956
    %v972 = vpop.xlane.xlu0 %971
    %973 = vadd.xlane.f32.xlu0 %v958
    %v974 = vpop.xlane.xlu0 %973
    %975 = vadd.xlane.f32.xlu0 %v960
    %v976 = vpop.xlane.xlu0 %975
    %977 = vadd.xlane.f32.xlu0 %v962
    %v978 = vpop.xlane.xlu0 %977
    %979 = vadd.xlane.f32.xlu0 %v964
    %v980 = vpop.xlane.xlu0 %979
    %v981 = vlog2.pop %v966
    %v982 = vmul.f32 %v981, 0.6931472
    %v983 = vlog2.pop %v968
    %v984 = vmul.f32 %v983, 0.6931472
    %v985 = vlog2.pop %v970
    %v986 = vmul.f32 %v985, 0.6931472
    %v987 = vlog2.pop %v972
    %v988 = vmul.f32 %v987, 0.6931472
    %v989 = vlog2.pop %v974
    %v990 = vmul.f32 %v989, 0.6931472
    %v991 = vlog2.pop %v976
    %v992 = vmul.f32 %v991, 0.6931472
    %v993 = vlog2.pop %v978
    %v994 = vmul.f32 %v993, 0.6931472
    %v995 = vlog2.pop %v980
    %v996 = vmul.f32 %v995, 0.6931472
    %v997 = vadd.f32 %v926, %v982
    %v998 = vadd.f32 %v928, %v984
    %v999 = vadd.f32 %v930, %v986
    %v1000 = vadd.f32 %v932, %v988
    %v1001 = vadd.f32 %v934, %v990
    %v1002 = vadd.f32 %v936, %v992
    %v1003 = vadd.f32 %v938, %v994
    %v1004 = vadd.f32 %v940, %v996
    %v1005 = vsub.f32 %v917, %v997
    %v1006 = vsub.f32 %v918, %v998
    %v1007 = vsub.f32 %v919, %v999
    %v1008 = vsub.f32 %v920, %v1000
    %v1009 = vsub.f32 %v921, %v1001
    %v1010 = vsub.f32 %v922, %v1002
    %v1011 = vsub.f32 %v923, %v1003
    %v1012 = vsub.f32 %v924, %v1004
    %v1013 = vmax.f32 %v1005, %v1009
    %v1014 = vmax.f32 %v1006, %v1010
    %v1015 = vmax.f32 %v1007, %v1011
    %v1016 = vmax.f32 %v1008, %v1012
    %v1017 = vmax.f32 %v1013, %v1014
    %v1018 = vmax.f32 %v1015, %v1016
    %v1019 = vmax.f32 %v1017, %v1018
    %v1020 = vrot.slane %v1019, 4
    %v1021 = vmax.f32 %v1019, %v1020
    %v1022 = vrot.slane %v1021, 2
    %v1023 = vmax.f32 %v1021, %v1022
    %v1024 = vrot.slane %v1023, 1
    %v1025 = vmax.f32 %v1023, %v1024
    %v1026 = vsub.f32 %v1005, %v1025
    %v1027 = vsub.f32 %v1006, %v1025
    %v1028 = vsub.f32 %v1007, %v1025
    %v1029 = vsub.f32 %v1008, %v1025
    %v1030 = vsub.f32 %v1009, %v1025
    %v1031 = vsub.f32 %v1010, %v1025
    %v1032 = vsub.f32 %v1011, %v1025
    %v1033 = vsub.f32 %v1012, %v1025
    %v1034 = vmul.f32 %v1026, 1.442695
    %v1035 = vpow.pop %v1034
    %v1036 = vmul.f32 %v1027, 1.442695
    %v1037 = vpow.pop %v1036
    %v1038 = vmul.f32 %v1028, 1.442695
    %v1039 = vpow.pop %v1038
    %v1040 = vmul.f32 %v1029, 1.442695
    %v1041 = vpow.pop %v1040
    %v1042 = vmul.f32 %v1030, 1.442695
    %v1043 = vpow.pop %v1042
    %v1044 = vmul.f32 %v1031, 1.442695
    %v1045 = vpow.pop %v1044
    %v1046 = vmul.f32 %v1032, 1.442695
    %v1047 = vpow.pop %v1046
    %v1048 = vmul.f32 %v1033, 1.442695
    %v1049 = vpow.pop %v1048
    %v1050 = vadd.f32 %v1035, %v1037
    %v1051 = vadd.f32 %v1050, %v1039
    %v1052 = vadd.f32 %v1051, %v1041
    %v1053 = vadd.f32 %v1052, %v1043
    %v1054 = vadd.f32 %v1053, %v1045
    %v1055 = vadd.f32 %v1054, %v1047
    %v1056 = vadd.f32 %v1055, %v1049
    %v1057 = vrot.slane %v1056, 4
    %v1058 = vadd.f32 %v1056, %v1057
    %v1059 = vrot.slane %v1058, 2
    %v1060 = vadd.f32 %v1058, %v1059
    %v1061 = vrot.slane %v1060, 1
    %v1062 = vadd.f32 %v1060, %v1061
    %v1063 = vlog2.pop %v1062
    %v1064 = vmul.f32 %v1063, 0.6931472
    %v1065 = vadd.f32 %v1025, %v1064
    %v1066 = vsub.f32 %v1005, %v1065
    %v1067 = vsub.f32 %v1006, %v1065
    %v1068 = vsub.f32 %v1007, %v1065
    %v1069 = vsub.f32 %v1008, %v1065
    %v1070 = vsub.f32 %v1009, %v1065
    %v1071 = vsub.f32 %v1010, %v1065
    %v1072 = vsub.f32 %v1011, %v1065
    %v1073 = vsub.f32 %v1012, %v1065
    %1074 = vmax.xlane.f32.xlu0 %v1066
    %v1075 = vpop.xlane.xlu0 %1074
    %1076 = vmax.xlane.f32.xlu0 %v1067
    %v1077 = vpop.xlane.xlu0 %1076
    %1078 = vmax.xlane.f32.xlu0 %v1068
    %v1079 = vpop.xlane.xlu0 %1078
    %1080 = vmax.xlane.f32.xlu0 %v1069
    %v1081 = vpop.xlane.xlu0 %1080
    %1082 = vmax.xlane.f32.xlu0 %v1070
    %v1083 = vpop.xlane.xlu0 %1082
    %1084 = vmax.xlane.f32.xlu0 %v1071
    %v1085 = vpop.xlane.xlu0 %1084
    %1086 = vmax.xlane.f32.xlu0 %v1072
    %v1087 = vpop.xlane.xlu0 %1086
    %1088 = vmax.xlane.f32.xlu0 %v1073
    %v1089 = vpop.xlane.xlu0 %1088
    %v1090 = vsub.f32 %v1066, %v1075
    %v1091 = vsub.f32 %v1067, %v1077
    %v1092 = vsub.f32 %v1068, %v1079
    %v1093 = vsub.f32 %v1069, %v1081
    %v1094 = vsub.f32 %v1070, %v1083
    %v1095 = vsub.f32 %v1071, %v1085
    %v1096 = vsub.f32 %v1072, %v1087
    %v1097 = vsub.f32 %v1073, %v1089
    %v1098 = vmul.f32 %v1090, 1.442695
    %v1099 = vpow.pop %v1098
    %v1100 = vmul.f32 %v1091, 1.442695
    %v1101 = vpow.pop %v1100
    %v1102 = vmul.f32 %v1092, 1.442695
    %v1103 = vpow.pop %v1102
    %v1104 = vmul.f32 %v1093, 1.442695
    %v1105 = vpow.pop %v1104
    %v1106 = vmul.f32 %v1094, 1.442695
    %v1107 = vpow.pop %v1106
    %v1108 = vmul.f32 %v1095, 1.442695
    %v1109 = vpow.pop %v1108
    %v1110 = vmul.f32 %v1096, 1.442695
    %v1111 = vpow.pop %v1110
    %v1112 = vmul.f32 %v1097, 1.442695
    %v1113 = vpow.pop %v1112
    %1114 = vadd.xlane.f32.xlu0 %v1099
    %v1115 = vpop.xlane.xlu0 %1114
    %1116 = vadd.xlane.f32.xlu0 %v1101
    %v1117 = vpop.xlane.xlu0 %1116
    %1118 = vadd.xlane.f32.xlu0 %v1103
    %v1119 = vpop.xlane.xlu0 %1118
    %1120 = vadd.xlane.f32.xlu0 %v1105
    %v1121 = vpop.xlane.xlu0 %1120
    %1122 = vadd.xlane.f32.xlu0 %v1107
    %v1123 = vpop.xlane.xlu0 %1122
    %1124 = vadd.xlane.f32.xlu0 %v1109
    %v1125 = vpop.xlane.xlu0 %1124
    %1126 = vadd.xlane.f32.xlu0 %v1111
    %v1127 = vpop.xlane.xlu0 %1126
    %1128 = vadd.xlane.f32.xlu0 %v1113
    %v1129 = vpop.xlane.xlu0 %1128
    %v1130 = vlog2.pop %v1115
    %v1131 = vmul.f32 %v1130, 0.6931472
    %v1132 = vlog2.pop %v1117
    %v1133 = vmul.f32 %v1132, 0.6931472
    %v1134 = vlog2.pop %v1119
    %v1135 = vmul.f32 %v1134, 0.6931472
    %v1136 = vlog2.pop %v1121
    %v1137 = vmul.f32 %v1136, 0.6931472
    %v1138 = vlog2.pop %v1123
    %v1139 = vmul.f32 %v1138, 0.6931472
    %v1140 = vlog2.pop %v1125
    %v1141 = vmul.f32 %v1140, 0.6931472
    %v1142 = vlog2.pop %v1127
    %v1143 = vmul.f32 %v1142, 0.6931472
    %v1144 = vlog2.pop %v1129
    %v1145 = vmul.f32 %v1144, 0.6931472
    %v1146 = vadd.f32 %v1075, %v1131
    %v1147 = vadd.f32 %v1077, %v1133
    %v1148 = vadd.f32 %v1079, %v1135
    %v1149 = vadd.f32 %v1081, %v1137
    %v1150 = vadd.f32 %v1083, %v1139
    %v1151 = vadd.f32 %v1085, %v1141
    %v1152 = vadd.f32 %v1087, %v1143
    %v1153 = vadd.f32 %v1089, %v1145
    %v1154 = vsub.f32 %v1066, %v1146
    %v1155 = vsub.f32 %v1067, %v1147
    %v1156 = vsub.f32 %v1068, %v1148
    %v1157 = vsub.f32 %v1069, %v1149
    %v1158 = vsub.f32 %v1070, %v1150
    %v1159 = vsub.f32 %v1071, %v1151
    %v1160 = vsub.f32 %v1072, %v1152
    %v1161 = vsub.f32 %v1073, %v1153
    %v1162 = vmax.f32 %v1154, %v1158
    %v1163 = vmax.f32 %v1155, %v1159
    %v1164 = vmax.f32 %v1156, %v1160
    %v1165 = vmax.f32 %v1157, %v1161
    %v1166 = vmax.f32 %v1162, %v1163
    %v1167 = vmax.f32 %v1164, %v1165
    %v1168 = vmax.f32 %v1166, %v1167
    %v1169 = vrot.slane %v1168, 4
    %v1170 = vmax.f32 %v1168, %v1169
    %v1171 = vrot.slane %v1170, 2
    %v1172 = vmax.f32 %v1170, %v1171
    %v1173 = vrot.slane %v1172, 1
    %v1174 = vmax.f32 %v1172, %v1173
    %v1175 = vsub.f32 %v1154, %v1174
    %v1176 = vsub.f32 %v1155, %v1174
    %v1177 = vsub.f32 %v1156, %v1174
    %v1178 = vsub.f32 %v1157, %v1174
    %v1179 = vsub.f32 %v1158, %v1174
    %v1180 = vsub.f32 %v1159, %v1174
    %v1181 = vsub.f32 %v1160, %v1174
    %v1182 = vsub.f32 %v1161, %v1174
    %v1183 = vmul.f32 %v1175, 1.442695
    %v1184 = vpow.pop %v1183
    %v1185 = vmul.f32 %v1176, 1.442695
    %v1186 = vpow.pop %v1185
    %v1187 = vmul.f32 %v1177, 1.442695
    %v1188 = vpow.pop %v1187
    %v1189 = vmul.f32 %v1178, 1.442695
    %v1190 = vpow.pop %v1189
    %v1191 = vmul.f32 %v1179, 1.442695
    %v1192 = vpow.pop %v1191
    %v1193 = vmul.f32 %v1180, 1.442695
    %v1194 = vpow.pop %v1193
    %v1195 = vmul.f32 %v1181, 1.442695
    %v1196 = vpow.pop %v1195
    %v1197 = vmul.f32 %v1182, 1.442695
    %v1198 = vpow.pop %v1197
    %v1199 = vadd.f32 %v1184, %v1186
    %v1200 = vadd.f32 %v1199, %v1188
    %v1201 = vadd.f32 %v1200, %v1190
    %v1202 = vadd.f32 %v1201, %v1192
    %v1203 = vadd.f32 %v1202, %v1194
    %v1204 = vadd.f32 %v1203, %v1196
    %v1205 = vadd.f32 %v1204, %v1198
    %v1206 = vrot.slane %v1205, 4
    %v1207 = vadd.f32 %v1205, %v1206
    %v1208 = vrot.slane %v1207, 2
    %v1209 = vadd.f32 %v1207, %v1208
    %v1210 = vrot.slane %v1209, 1
    %v1211 = vadd.f32 %v1209, %v1210
    %v1212 = vlog2.pop %v1211
    %v1213 = vmul.f32 %v1212, 0.6931472
    %v1214 = vadd.f32 %v1174, %v1213
    %v1215 = vsub.f32 %v1154, %v1214
    %v1216 = vsub.f32 %v1155, %v1214
    %v1217 = vsub.f32 %v1156, %v1214
    %v1218 = vsub.f32 %v1157, %v1214
    %v1219 = vsub.f32 %v1158, %v1214
    %v1220 = vsub.f32 %v1159, %v1214
    %v1221 = vsub.f32 %v1160, %v1214
    %v1222 = vsub.f32 %v1161, %v1214
    %1223 = vmax.xlane.f32.xlu0 %v1215
    %v1224 = vpop.xlane.xlu0 %1223
    %1225 = vmax.xlane.f32.xlu0 %v1216
    %v1226 = vpop.xlane.xlu0 %1225
    %1227 = vmax.xlane.f32.xlu0 %v1217
    %v1228 = vpop.xlane.xlu0 %1227
    %1229 = vmax.xlane.f32.xlu0 %v1218
    %v1230 = vpop.xlane.xlu0 %1229
    %1231 = vmax.xlane.f32.xlu0 %v1219
    %v1232 = vpop.xlane.xlu0 %1231
    %1233 = vmax.xlane.f32.xlu0 %v1220
    %v1234 = vpop.xlane.xlu0 %1233
    %1235 = vmax.xlane.f32.xlu0 %v1221
    %v1236 = vpop.xlane.xlu0 %1235
    %1237 = vmax.xlane.f32.xlu0 %v1222
    %v1238 = vpop.xlane.xlu0 %1237
    %v1239 = vsub.f32 %v1215, %v1224
    %v1240 = vsub.f32 %v1216, %v1226
    %v1241 = vsub.f32 %v1217, %v1228
    %v1242 = vsub.f32 %v1218, %v1230
    %v1243 = vsub.f32 %v1219, %v1232
    %v1244 = vsub.f32 %v1220, %v1234
    %v1245 = vsub.f32 %v1221, %v1236
    %v1246 = vsub.f32 %v1222, %v1238
    %v1247 = vmul.f32 %v1239, 1.442695
    %v1248 = vpow.pop %v1247
    %v1249 = vmul.f32 %v1240, 1.442695
    %v1250 = vpow.pop %v1249
    %v1251 = vmul.f32 %v1241, 1.442695
    %v1252 = vpow.pop %v1251
    %v1253 = vmul.f32 %v1242, 1.442695
    %v1254 = vpow.pop %v1253
    %v1255 = vmul.f32 %v1243, 1.442695
    %v1256 = vpow.pop %v1255
    %v1257 = vmul.f32 %v1244, 1.442695
    %v1258 = vpow.pop %v1257
    %v1259 = vmul.f32 %v1245, 1.442695
    %v1260 = vpow.pop %v1259
    %v1261 = vmul.f32 %v1246, 1.442695
    %v1262 = vpow.pop %v1261
    %1263 = vadd.xlane.f32.xlu0 %v1248
    %v1264 = vpop.xlane.xlu0 %1263
    %1265 = vadd.xlane.f32.xlu0 %v1250
    %v1266 = vpop.xlane.xlu0 %1265
    %1267 = vadd.xlane.f32.xlu0 %v1252
    %v1268 = vpop.xlane.xlu0 %1267
    %1269 = vadd.xlane.f32.xlu0 %v1254
    %v1270 = vpop.xlane.xlu0 %1269
    %1271 = vadd.xlane.f32.xlu0 %v1256
    %v1272 = vpop.xlane.xlu0 %1271
    %1273 = vadd.xlane.f32.xlu0 %v1258
    %v1274 = vpop.xlane.xlu0 %1273
    %1275 = vadd.xlane.f32.xlu0 %v1260
    %v1276 = vpop.xlane.xlu0 %1275
    %1277 = vadd.xlane.f32.xlu0 %v1262
    %v1278 = vpop.xlane.xlu0 %1277
    %v1279 = vlog2.pop %v1264
    %v1280 = vmul.f32 %v1279, 0.6931472
    %v1281 = vlog2.pop %v1266
    %v1282 = vmul.f32 %v1281, 0.6931472
    %v1283 = vlog2.pop %v1268
    %v1284 = vmul.f32 %v1283, 0.6931472
    %v1285 = vlog2.pop %v1270
    %v1286 = vmul.f32 %v1285, 0.6931472
    %v1287 = vlog2.pop %v1272
    %v1288 = vmul.f32 %v1287, 0.6931472
    %v1289 = vlog2.pop %v1274
    %v1290 = vmul.f32 %v1289, 0.6931472
    %v1291 = vlog2.pop %v1276
    %v1292 = vmul.f32 %v1291, 0.6931472
    %v1293 = vlog2.pop %v1278
    %v1294 = vmul.f32 %v1293, 0.6931472
    %v1295 = vadd.f32 %v1224, %v1280
    %v1296 = vadd.f32 %v1226, %v1282
    %v1297 = vadd.f32 %v1228, %v1284
    %v1298 = vadd.f32 %v1230, %v1286
    %v1299 = vadd.f32 %v1232, %v1288
    %v1300 = vadd.f32 %v1234, %v1290
    %v1301 = vadd.f32 %v1236, %v1292
    %v1302 = vadd.f32 %v1238, %v1294
    %v1303 = vsub.f32 %v1215, %v1295
    %v1304 = vsub.f32 %v1216, %v1296
    %v1305 = vsub.f32 %v1217, %v1297
    %v1306 = vsub.f32 %v1218, %v1298
    %v1307 = vsub.f32 %v1219, %v1299
    %v1308 = vsub.f32 %v1220, %v1300
    %v1309 = vsub.f32 %v1221, %v1301
    %v1310 = vsub.f32 %v1222, %v1302
    %v1311 = vmax.f32 %v1303, %v1307
    %v1312 = vmax.f32 %v1304, %v1308
    %v1313 = vmax.f32 %v1305, %v1309
    %v1314 = vmax.f32 %v1306, %v1310
    %v1315 = vmax.f32 %v1311, %v1312
    %v1316 = vmax.f32 %v1313, %v1314
    %v1317 = vmax.f32 %v1315, %v1316
    %v1318 = vrot.slane %v1317, 4
    %v1319 = vmax.f32 %v1317, %v1318
    %v1320 = vrot.slane %v1319, 2
    %v1321 = vmax.f32 %v1319, %v1320
    %v1322 = vrot.slane %v1321, 1
    %v1323 = vmax.f32 %v1321, %v1322
    %v1324 = vsub.f32 %v1303, %v1323
    %v1325 = vsub.f32 %v1304, %v1323
    %v1326 = vsub.f32 %v1305, %v1323
    %v1327 = vsub.f32 %v1306, %v1323
    %v1328 = vsub.f32 %v1307, %v1323
    %v1329 = vsub.f32 %v1308, %v1323
    %v1330 = vsub.f32 %v1309, %v1323
    %v1331 = vsub.f32 %v1310, %v1323
    %v1332 = vmul.f32 %v1324, 1.442695
    %v1333 = vpow.pop %v1332
    %v1334 = vmul.f32 %v1325, 1.442695
    %v1335 = vpow.pop %v1334
    %v1336 = vmul.f32 %v1326, 1.442695
    %v1337 = vpow.pop %v1336
    %v1338 = vmul.f32 %v1327, 1.442695
    %v1339 = vpow.pop %v1338
    %v1340 = vmul.f32 %v1328, 1.442695
    %v1341 = vpow.pop %v1340
    %v1342 = vmul.f32 %v1329, 1.442695
    %v1343 = vpow.pop %v1342
    %v1344 = vmul.f32 %v1330, 1.442695
    %v1345 = vpow.pop %v1344
    %v1346 = vmul.f32 %v1331, 1.442695
    %v1347 = vpow.pop %v1346
    %v1348 = vadd.f32 %v1333, %v1335
    %v1349 = vadd.f32 %v1348, %v1337
    %v1350 = vadd.f32 %v1349, %v1339
    %v1351 = vadd.f32 %v1350, %v1341
    %v1352 = vadd.f32 %v1351, %v1343
    %v1353 = vadd.f32 %v1352, %v1345
    %v1354 = vadd.f32 %v1353, %v1347
    %v1355 = vrot.slane %v1354, 4
    %v1356 = vadd.f32 %v1354, %v1355
    %v1357 = vrot.slane %v1356, 2
    %v1358 = vadd.f32 %v1356, %v1357
    %v1359 = vrot.slane %v1358, 1
    %v1360 = vadd.f32 %v1358, %v1359
    %v1361 = vlog2.pop %v1360
    %v1362 = vmul.f32 %v1361, 0.6931472
    %v1363 = vadd.f32 %v1323, %v1362
    %v1364 = vsub.f32 %v1303, %v1363
    %v1365 = vsub.f32 %v1304, %v1363
    %v1366 = vsub.f32 %v1305, %v1363
    %v1367 = vsub.f32 %v1306, %v1363
    %v1368 = vsub.f32 %v1307, %v1363
    %v1369 = vsub.f32 %v1308, %v1363
    %v1370 = vsub.f32 %v1309, %v1363
    %v1371 = vsub.f32 %v1310, %v1363
    %1372 = vmax.xlane.f32.xlu0 %v1364
    %v1373 = vpop.xlane.xlu0 %1372
    %1374 = vmax.xlane.f32.xlu0 %v1365
    %v1375 = vpop.xlane.xlu0 %1374
    %1376 = vmax.xlane.f32.xlu0 %v1366
    %v1377 = vpop.xlane.xlu0 %1376
    %1378 = vmax.xlane.f32.xlu0 %v1367
    %v1379 = vpop.xlane.xlu0 %1378
    %1380 = vmax.xlane.f32.xlu0 %v1368
    %v1381 = vpop.xlane.xlu0 %1380
    %1382 = vmax.xlane.f32.xlu0 %v1369
    %v1383 = vpop.xlane.xlu0 %1382
    %1384 = vmax.xlane.f32.xlu0 %v1370
    %v1385 = vpop.xlane.xlu0 %1384
    %1386 = vmax.xlane.f32.xlu0 %v1371
    %v1387 = vpop.xlane.xlu0 %1386
    %v1388 = vsub.f32 %v1364, %v1373
    %v1389 = vsub.f32 %v1365, %v1375
    %v1390 = vsub.f32 %v1366, %v1377
    %v1391 = vsub.f32 %v1367, %v1379
    %v1392 = vsub.f32 %v1368, %v1381
    %v1393 = vsub.f32 %v1369, %v1383
    %v1394 = vsub.f32 %v1370, %v1385
    %v1395 = vsub.f32 %v1371, %v1387
    %v1396 = vmul.f32 %v1388, 1.442695
    %v1397 = vpow.pop %v1396
    %v1398 = vmul.f32 %v1389, 1.442695
    %v1399 = vpow.pop %v1398
    %v1400 = vmul.f32 %v1390, 1.442695
    %v1401 = vpow.pop %v1400
    %v1402 = vmul.f32 %v1391, 1.442695
    %v1403 = vpow.pop %v1402
    %v1404 = vmul.f32 %v1392, 1.442695
    %v1405 = vpow.pop %v1404
    %v1406 = vmul.f32 %v1393, 1.442695
    %v1407 = vpow.pop %v1406
    %v1408 = vmul.f32 %v1394, 1.442695
    %v1409 = vpow.pop %v1408
    %v1410 = vmul.f32 %v1395, 1.442695
    %v1411 = vpow.pop %v1410
    %1412 = vadd.xlane.f32.xlu0 %v1397
    %v1413 = vpop.xlane.xlu0 %1412
    %1414 = vadd.xlane.f32.xlu0 %v1399
    %v1415 = vpop.xlane.xlu0 %1414
    %1416 = vadd.xlane.f32.xlu0 %v1401
    %v1417 = vpop.xlane.xlu0 %1416
    %1418 = vadd.xlane.f32.xlu0 %v1403
    %v1419 = vpop.xlane.xlu0 %1418
    %1420 = vadd.xlane.f32.xlu0 %v1405
    %v1421 = vpop.xlane.xlu0 %1420
    %1422 = vadd.xlane.f32.xlu0 %v1407
    %v1423 = vpop.xlane.xlu0 %1422
    %1424 = vadd.xlane.f32.xlu0 %v1409
    %v1425 = vpop.xlane.xlu0 %1424
    %1426 = vadd.xlane.f32.xlu0 %v1411
    %v1427 = vpop.xlane.xlu0 %1426
    %v1428 = vlog2.pop %v1413
    %v1429 = vmul.f32 %v1428, 0.6931472
    %v1430 = vlog2.pop %v1415
    %v1431 = vmul.f32 %v1430, 0.6931472
    %v1432 = vlog2.pop %v1417
    %v1433 = vmul.f32 %v1432, 0.6931472
    %v1434 = vlog2.pop %v1419
    %v1435 = vmul.f32 %v1434, 0.6931472
    %v1436 = vlog2.pop %v1421
    %v1437 = vmul.f32 %v1436, 0.6931472
    %v1438 = vlog2.pop %v1423
    %v1439 = vmul.f32 %v1438, 0.6931472
    %v1440 = vlog2.pop %v1425
    %v1441 = vmul.f32 %v1440, 0.6931472
    %v1442 = vlog2.pop %v1427
    %v1443 = vmul.f32 %v1442, 0.6931472
    %v1444 = vadd.f32 %v1373, %v1429
    %v1445 = vadd.f32 %v1375, %v1431
    %v1446 = vadd.f32 %v1377, %v1433
    %v1447 = vadd.f32 %v1379, %v1435
    %v1448 = vadd.f32 %v1381, %v1437
    %v1449 = vadd.f32 %v1383, %v1439
    %v1450 = vadd.f32 %v1385, %v1441
    %v1451 = vadd.f32 %v1387, %v1443
    %v1452 = vsub.f32 %v1364, %v1444
    %v1453 = vsub.f32 %v1365, %v1445
    %v1454 = vsub.f32 %v1366, %v1446
    %v1455 = vsub.f32 %v1367, %v1447
    %v1456 = vsub.f32 %v1368, %v1448
    %v1457 = vsub.f32 %v1369, %v1449
    %v1458 = vsub.f32 %v1370, %v1450
    %v1459 = vsub.f32 %v1371, %v1451
    %v1460 = vmax.f32 %v1452, %v1456
    %v1461 = vmax.f32 %v1453, %v1457
    %v1462 = vmax.f32 %v1454, %v1458
    %v1463 = vmax.f32 %v1455, %v1459
    %v1464 = vmax.f32 %v1460, %v1461
    %v1465 = vmax.f32 %v1462, %v1463
    %v1466 = vmax.f32 %v1464, %v1465
    %v1467 = vrot.slane %v1466, 4
    %v1468 = vmax.f32 %v1466, %v1467
    %v1469 = vrot.slane %v1468, 2
    %v1470 = vmax.f32 %v1468, %v1469
    %v1471 = vrot.slane %v1470, 1
    %v1472 = vmax.f32 %v1470, %v1471
    %v1473 = vsub.f32 %v1452, %v1472
    %v1474 = vsub.f32 %v1453, %v1472
    %v1475 = vsub.f32 %v1454, %v1472
    %v1476 = vsub.f32 %v1455, %v1472
    %v1477 = vsub.f32 %v1456, %v1472
    %v1478 = vsub.f32 %v1457, %v1472
    %v1479 = vsub.f32 %v1458, %v1472
    %v1480 = vsub.f32 %v1459, %v1472
    %v1481 = vmul.f32 %v1473, 1.442695
    %v1482 = vpow.pop %v1481
    %v1483 = vmul.f32 %v1474, 1.442695
    %v1484 = vpow.pop %v1483
    %v1485 = vmul.f32 %v1475, 1.442695
    %v1486 = vpow.pop %v1485
    %v1487 = vmul.f32 %v1476, 1.442695
    %v1488 = vpow.pop %v1487
    %v1489 = vmul.f32 %v1477, 1.442695
    %v1490 = vpow.pop %v1489
    %v1491 = vmul.f32 %v1478, 1.442695
    %v1492 = vpow.pop %v1491
    %v1493 = vmul.f32 %v1479, 1.442695
    %v1494 = vpow.pop %v1493
    %v1495 = vmul.f32 %v1480, 1.442695
    %v1496 = vpow.pop %v1495
    %v1497 = vadd.f32 %v1482, %v1484
    %v1498 = vadd.f32 %v1497, %v1486
    %v1499 = vadd.f32 %v1498, %v1488
    %v1500 = vadd.f32 %v1499, %v1490
    %v1501 = vadd.f32 %v1500, %v1492
    %v1502 = vadd.f32 %v1501, %v1494
    %v1503 = vadd.f32 %v1502, %v1496
    %v1504 = vrot.slane %v1503, 4
    %v1505 = vadd.f32 %v1503, %v1504
    %v1506 = vrot.slane %v1505, 2
    %v1507 = vadd.f32 %v1505, %v1506
    %v1508 = vrot.slane %v1507, 1
    %v1509 = vadd.f32 %v1507, %v1508
    %v1510 = vlog2.pop %v1509
    %v1511 = vmul.f32 %v1510, 0.6931472
    %v1512 = vadd.f32 %v1472, %v1511
    %v1513 = vsub.f32 %v1452, %v1512
    %v1514 = vsub.f32 %v1453, %v1512
    %v1515 = vsub.f32 %v1454, %v1512
    %v1516 = vsub.f32 %v1455, %v1512
    %v1517 = vsub.f32 %v1456, %v1512
    %v1518 = vsub.f32 %v1457, %v1512
    %v1519 = vsub.f32 %v1458, %v1512
    %v1520 = vsub.f32 %v1459, %v1512
    %v1521 = vmul.f32 %v1513, 1.442695
    %v1522 = vpow.pop %v1521
    %v1523 = vmul.f32 %v1514, 1.442695
    %v1524 = vpow.pop %v1523
    %v1525 = vmul.f32 %v1515, 1.442695
    %v1526 = vpow.pop %v1525
    %v1527 = vmul.f32 %v1516, 1.442695
    %v1528 = vpow.pop %v1527
    %v1529 = vmul.f32 %v1517, 1.442695
    %v1530 = vpow.pop %v1529
    %v1531 = vmul.f32 %v1518, 1.442695
    %v1532 = vpow.pop %v1531
    %v1533 = vmul.f32 %v1519, 1.442695
    %v1534 = vpow.pop %v1533
    %v1535 = vmul.f32 %v1520, 1.442695
    %v1536 = vpow.pop %v1535
    %1537 = vst [vmem:[#allocation5] sm:$0xff] %v1522
    %1538 = vst [vmem:[#allocation5 + $0x8] sm:$0xff] %v1524
    %1539 = vst [vmem:[#allocation5 + $0x10] sm:$0xff] %v1526
    %1540 = vst [vmem:[#allocation5 + $0x18] sm:$0xff] %v1528
    %1541 = vst [vmem:[#allocation5 + $0x20] sm:$0xff] %v1530
    %1542 = vst [vmem:[#allocation5 + $0x28] sm:$0xff] %v1532
    %1543 = vst [vmem:[#allocation5 + $0x30] sm:$0xff] %v1534
    %1544 = vst [vmem:[#allocation5 + $0x38] sm:$0xff] %v1536
    // Predicated region
    $region10: #{tpu_custom_call.1} parent=1 // pred_check
      _
    $region11: #{tpu_custom_call.1} parent=1 // pred_check_branch
      %1546 = sbr.rel (0) target = $region13
    $region12: #{tpu_custom_call.1} parent=1 // pred_region
      %s1548 = ssub.s32 1024, 1024
      %1549 = vsyncadd [#allocation4], %s1548
      %s1550 = sshll.u32 [#allocation5], 4
      %s1551 = int_to_ptr.vmem [resolvable:$true] %s1550
      %1556 = dma.vmem_to_hbm [thread:$0]  %s1551, 1024, %s1, [#allocation4], 128, 128, 8
    $region13: #{tpu_custom_call.1} parent=1 // pred_fallthru
      _
    // Predicated region
    $region14: #{tpu_custom_call.1} parent=1 // pred_check
      _
    $region15: #{tpu_custom_call.1} parent=1 // pred_check_branch
      %1558 = sbr.rel (0) target = $region17
    $region16: #{tpu_custom_call.1} parent=1 // pred_region
      %1559 = dma.done [#allocation4], 1024
    $region17: #{tpu_custom_call.1} parent=1 // pred_fallthru
      _
    %1560 = vsyncpa [#allocation3], 1
    %1561 = vsyncpa [#allocation4], 1

</llo_original>
